<compile_context>
chip_gen: v7x
topology: tpu7x:2x2x1
jax: 0.10.0
libtpu: 0.0.40
codegen_flags: <defaults>
</compile_context>

<pallas_src>
import jax
import jax.numpy as jnp
import numpy as np
from jax import lax
from jax.experimental import pallas as pl
from jax.experimental.pallas import tpu as pltpu


N_CLASSES = 2
C_PAD = 128          # lane-dense padded class dimension for the predictor output


# ----------------------------- fused Pallas kernel ---------------------------

def fused_gnn_kernel(
    # edge indices (tiny int32 VMEM arrays) + precomputed 1/deg
    src_col_ref, dst_col_ref, dst_row_ref, inv_deg_ref,
    # features
    x_ref, ea_ref,
    # layer 1 (split weights == concatenated-input linear)
    wm1x_ref, wm1e_ref, bm1_ref, wa1x_ref, wa1a_ref, ba1_ref,
    # layer 2
    wm2x_ref, wm2e_ref, bm2_ref, wa2x_ref, wa2a_ref, ba2_ref,
    # predictor (lane-padded to C_PAD columns)
    wpu_ref, wpv_ref, bp_ref,
    # output (E, C_PAD) lane-dense
    out_ref,
):
    n_nodes = x_ref.shape[0]
    n_edges = ea_ref.shape[0]
    f32 = jnp.float32

    # ---- exact 0/1 one-hot gather/scatter masks (two vectorized compares) ----
    col_node_ids = lax.broadcasted_iota(jnp.int32, (n_edges, n_nodes), 1)   # [E,N]
    row_node_ids = lax.broadcasted_iota(jnp.int32, (n_nodes, n_edges), 0)   # [N,E]
    gather_src  = (col_node_ids == src_col_ref[...]).astype(f32)            # [E,N]
    gather_dst  = (col_node_ids == dst_col_ref[...]).astype(f32)            # [E,N]
    scatter_dst = (row_node_ids == dst_row_ref[...]).astype(f32)            # [N,E]

    inv_deg = inv_deg_ref[...]                                               # [N,1]
    x = x_ref[...]
    ea = ea_ref[...]

    # ============================ SAGE layer 1 ============================
    x_src = jnp.dot(gather_src, x, preferred_element_type=f32)              # [E,d_in]
    msg1 = (jnp.dot(x_src, wm1x_ref[...], preferred_element_type=f32)
            + jnp.dot(ea, wm1e_ref[...], preferred_element_type=f32)
            + bm1_ref[...])                                                  # [E,128]
    # scatter-sum by dst on the MXU, then separate VPU mean normalization
    aggr1 = jnp.dot(scatter_dst, msg1, preferred_element_type=f32) * inv_deg
    h1 = jnp.maximum(
        jnp.dot(x, wa1x_ref[...], preferred_element_type=f32)
        + jnp.dot(aggr1, wa1a_ref[...], preferred_element_type=f32)
        + ba1_ref[...], 0.0)                                                 # [N,128]

    # ============================ SAGE layer 2 ============================
    h1_src = jnp.dot(gather_src, h1, preferred_element_type=f32)            # [E,128]
    msg2 = (jnp.dot(h1_src, wm2x_ref[...], preferred_element_type=f32)
            + jnp.dot(ea, wm2e_ref[...], preferred_element_type=f32)
            + bm2_ref[...])                                                  # [E,d_out]
    aggr2 = jnp.dot(scatter_dst, msg2, preferred_element_type=f32) * inv_deg
    h2 = jnp.maximum(
        jnp.dot(h1, wa2x_ref[...], preferred_element_type=f32)
        + jnp.dot(aggr2, wa2a_ref[...], preferred_element_type=f32)
        + ba2_ref[...], 0.0)                                                 # [N,d_out]

    # ============================ edge predictor ==========================
    h2_src = jnp.dot(gather_src, h2, preferred_element_type=f32)            # [E,d_out]
    h2_dst = jnp.dot(gather_dst, h2, preferred_element_type=f32)            # [E,d_out]
    out_ref[...] = (jnp.dot(h2_src, wpu_ref[...], preferred_element_type=f32)
                    + jnp.dot(h2_dst, wpv_ref[...], preferred_element_type=f32)
                    + bp_ref[...])                                           # [E,C_PAD]


# --------------------------------- wrapper -----------------------------------

def model_forward(params, x, edge_index, edge_attr):
    N, d_in = x.shape
    E, d_e = edge_attr.shape
    src = edge_index[0].astype(jnp.int32)
    dst = edge_index[1].astype(jnp.int32)

    l1, l2 = params["layers"]
    d_h = l1["b_msg"].shape[0]          # 128
    d_out = l2["b_msg"].shape[0]        # ndim_out

    # split weights over the concatenated inputs:
    #   cat([x_src, ea]) @ W_msg   == x_src @ Wx + ea @ We
    #   cat([x, aggr])   @ W_apply == x @ Wax + aggr @ Waa
    wm1x, wm1e = l1["w_msg"][:d_in], l1["w_msg"][d_in:]
    wa1x, wa1a = l1["w_apply"][:d_in], l1["w_apply"][d_in:]
    wm2x, wm2e = l2["w_msg"][:d_h], l2["w_msg"][d_h:]
    wa2x, wa2a = l2["w_apply"][:d_h], l2["w_apply"][d_h:]

    # lane-dense predictor head: pad n_classes -> C_PAD columns, slice outside
    wp = params["pred"]["w"]            # (2*d_out, n_classes)
    bp = params["pred"]["b"]
    n_cls = wp.shape[1]
    wpu = jnp.pad(wp[:d_out], ((0, 0), (0, C_PAD - n_cls)))
    wpv = jnp.pad(wp[d_out:], ((0, 0), (0, C_PAD - n_cls)))
    bp_pad = jnp.pad(bp.reshape(1, -1), ((0, 0), (0, C_PAD - n_cls)))

    # in-degree / mean normalization precomputed outside the kernel (cheap XLA)
    deg = jnp.zeros((N,), jnp.float32).at[dst].add(1.0)
    inv_deg = (1.0 / jnp.maximum(deg, 1.0)).reshape(N, 1)

    src_col = src.reshape(E, 1)
    dst_col = dst.reshape(E, 1)
    dst_row = dst.reshape(1, E)

    vmem = pl.BlockSpec(memory_space=pltpu.MemorySpace.VMEM)
    n_inputs = 21

    logits_pad = pl.pallas_call(
        fused_gnn_kernel,
        out_shape=jax.ShapeDtypeStruct((E, C_PAD), jnp.float32),
        in_specs=[vmem] * n_inputs,
        out_specs=vmem,
        compiler_params=pltpu.CompilerParams(
            vmem_limit_bytes=64 * 1024 * 1024,
        ),
    )(src_col, dst_col, dst_row, inv_deg, x, edge_attr,
      wm1x, wm1e, l1["b_msg"].reshape(1, -1), wa1x, wa1a, l1["b_apply"].reshape(1, -1),
      wm2x, wm2e, l2["b_msg"].reshape(1, -1), wa2x, wa2a, l2["b_apply"].reshape(1, -1),
      wpu, wpv, bp_pad)

    return logits_pad[:, :n_cls]


# -------------------------- parameter construction ---------------------------

def init_params(key, ndim_in, ndim_out, edim, n_classes=2):
    dims = [(ndim_in, 128), (128, ndim_out)]
    params = {"layers": []}
    for (d_in, d_out) in dims:
        key, k1, k2 = jax.random.split(key, 3)
        params["layers"].append({
            "w_msg": 0.1 * jax.random.normal(k1, (d_in + edim, d_out), jnp.float32),
            "b_msg": 0.01 * jnp.arange(d_out, dtype=jnp.float32),
            "w_apply": 0.1 * jax.random.normal(k2, (d_in + d_out, d_out), jnp.float32),
            "b_apply": 0.02 * jnp.arange(d_out, dtype=jnp.float32),
        })
    key, kp = jax.random.split(key)
    params["pred"] = {
        "w": 0.1 * jax.random.normal(kp, (2 * ndim_out, n_classes), jnp.float32),
        "b": jnp.array([0.1, -0.1], dtype=jnp.float32),
    }
    return params


# ---------------------------------- reference ---------------------------------

def reference_forward(params, x, edge_index, edge_attr, num_nodes):
    src, dst = edge_index[0], edge_index[1]
    h = x
    for lp in params["layers"]:
        h_src = h[src]
        msg = jnp.concatenate([h_src, edge_attr], axis=1) @ lp["w_msg"] + lp["b_msg"]
        summed = jnp.zeros((num_nodes, msg.shape[1]), jnp.float32).at[dst].add(msg)
        cnt = jnp.zeros((num_nodes,), jnp.float32).at[dst].add(1.0)
        aggr = summed / jnp.maximum(cnt, 1.0)[:, None]
        h = jax.nn.relu(jnp.concatenate([h, aggr], axis=1) @ lp["w_apply"]
                        + lp["b_apply"])
    edge_in = jnp.concatenate([h[src], h[dst]], axis=1)
    return edge_in @ params["pred"]["w"] + params["pred"]["b"]


# ------------------------------------ main ------------------------------------

if __name__ == "__main__":
    NDIM_IN, NDIM_OUT, EDIM = 16, 32, 8
    N_NODES, N_EDGES = 8, 16

    key = jax.random.PRNGKey(0)
    key, kx, ke, ks, kd = jax.random.split(key, 5)

    x = jax.random.normal(kx, (N_NODES, NDIM_IN), jnp.float32)
    edge_attr = jax.random.normal(ke, (N_EDGES, EDIM), jnp.float32)
    src = jax.random.randint(ks, (N_EDGES,), 0, N_NODES, dtype=jnp.int32)
    dst = jax.random.randint(kd, (N_EDGES,), 0, N_NODES, dtype=jnp.int32)
    edge_index = jnp.stack([src, dst], axis=0)

    params = init_params(jax.random.PRNGKey(42), NDIM_IN, NDIM_OUT, EDIM)

    logits = model_forward(params, x, edge_index, edge_attr)
    logits = jax.block_until_ready(logits)

    ref = reference_forward(params, x, edge_index, edge_attr, N_NODES)
    np.testing.assert_allclose(np.asarray(logits), np.asarray(ref),
                               rtol=1e-4, atol=1e-4)
    assert logits.shape == (N_EDGES, 2)
    print("KERNEL_OK")
</pallas_src>

<mosaic_0001>
module attributes {stable_mosaic.version = 11 : i64} {
  func.func @fused_gnn_kernel(%arg0: memref<16x1xi32, #tpu.memory_space<vmem>>, %arg1: memref<16x1xi32, #tpu.memory_space<vmem>>, %arg2: memref<1x16xi32, #tpu.memory_space<vmem>>, %arg3: memref<8x1xf32, #tpu.memory_space<vmem>>, %arg4: memref<8x16xf32, #tpu.memory_space<vmem>>, %arg5: memref<16x8xf32, #tpu.memory_space<vmem>>, %arg6: memref<16x128xf32, #tpu.memory_space<vmem>>, %arg7: memref<8x128xf32, #tpu.memory_space<vmem>>, %arg8: memref<1x128xf32, #tpu.memory_space<vmem>>, %arg9: memref<16x128xf32, #tpu.memory_space<vmem>>, %arg10: memref<128x128xf32, #tpu.memory_space<vmem>>, %arg11: memref<1x128xf32, #tpu.memory_space<vmem>>, %arg12: memref<128x32xf32, #tpu.memory_space<vmem>>, %arg13: memref<8x32xf32, #tpu.memory_space<vmem>>, %arg14: memref<1x32xf32, #tpu.memory_space<vmem>>, %arg15: memref<128x32xf32, #tpu.memory_space<vmem>>, %arg16: memref<32x32xf32, #tpu.memory_space<vmem>>, %arg17: memref<1x32xf32, #tpu.memory_space<vmem>>, %arg18: memref<32x128xf32, #tpu.memory_space<vmem>>, %arg19: memref<32x128xf32, #tpu.memory_space<vmem>>, %arg20: memref<1x128xf32, #tpu.memory_space<vmem>>, %arg21: memref<16x128xf32, #tpu.memory_space<vmem>>) attributes {dimension_semantics = [], scalar_prefetch = 0 : i64, scratch_operands = 0 : i64, tpu.core_type = #tpu.core_type<tc>} {
    %0 = tpu.iota {dimensions = array<i32: 1>} : vector<16x8xi32>
    %1 = tpu.iota {dimensions = array<i32: 0>} : vector<8x16xi32>
    %c0 = arith.constant 0 : index
    %c0_0 = arith.constant 0 : index
    %2 = vector.load %arg0[%c0, %c0_0] : memref<16x1xi32, #tpu.memory_space<vmem>>, vector<16x1xi32>
    %3 = vector.broadcast %2 : vector<16x1xi32> to vector<16x8xi32>
    %4 = arith.cmpi eq, %0, %3 : vector<16x8xi32>
    %5 = arith.extui %4 : vector<16x8xi1> to vector<16x8xi32>
    %6 = arith.sitofp %5 : vector<16x8xi32> to vector<16x8xf32>
    %c0_1 = arith.constant 0 : index
    %c0_2 = arith.constant 0 : index
    %7 = vector.load %arg1[%c0_1, %c0_2] : memref<16x1xi32, #tpu.memory_space<vmem>>, vector<16x1xi32>
    %8 = vector.broadcast %7 : vector<16x1xi32> to vector<16x8xi32>
    %9 = arith.cmpi eq, %0, %8 : vector<16x8xi32>
    %10 = arith.extui %9 : vector<16x8xi1> to vector<16x8xi32>
    %11 = arith.sitofp %10 : vector<16x8xi32> to vector<16x8xf32>
    %c0_3 = arith.constant 0 : index
    %c0_4 = arith.constant 0 : index
    %12 = vector.load %arg2[%c0_3, %c0_4] : memref<1x16xi32, #tpu.memory_space<vmem>>, vector<1x16xi32>
    %13 = vector.broadcast %12 : vector<1x16xi32> to vector<8x16xi32>
    %14 = arith.cmpi eq, %1, %13 : vector<8x16xi32>
    %15 = arith.extui %14 : vector<8x16xi1> to vector<8x16xi32>
    %16 = arith.sitofp %15 : vector<8x16xi32> to vector<8x16xf32>
    %c0_5 = arith.constant 0 : index
    %c0_6 = arith.constant 0 : index
    %17 = vector.load %arg3[%c0_5, %c0_6] : memref<8x1xf32, #tpu.memory_space<vmem>>, vector<8x1xf32>
    %c0_7 = arith.constant 0 : index
    %c0_8 = arith.constant 0 : index
    %18 = vector.load %arg4[%c0_7, %c0_8] : memref<8x16xf32, #tpu.memory_space<vmem>>, vector<8x16xf32>
    %c0_9 = arith.constant 0 : index
    %c0_10 = arith.constant 0 : index
    %19 = vector.load %arg5[%c0_9, %c0_10] : memref<16x8xf32, #tpu.memory_space<vmem>>, vector<16x8xf32>
    %cst = arith.constant dense<0.000000e+00> : vector<16x16xf32>
    %20 = tpu.matmul %6, %18, %cst {dimension_numbers = #tpu.dot_dimension_numbers<[1], [0], [0], [1], [0, 0, 1, 1], [], []>} : vector<16x8xf32>, vector<8x16xf32>, vector<16x16xf32> -> vector<16x16xf32>
    %c0_11 = arith.constant 0 : index
    %c0_12 = arith.constant 0 : index
    %21 = vector.load %arg6[%c0_11, %c0_12] : memref<16x128xf32, #tpu.memory_space<vmem>>, vector<16x128xf32>
    %cst_13 = arith.constant dense<0.000000e+00> : vector<16x128xf32>
    %22 = tpu.matmul %20, %21, %cst_13 {dimension_numbers = #tpu.dot_dimension_numbers<[1], [0], [0], [1], [0, 0, 1, 1], [], []>} : vector<16x16xf32>, vector<16x128xf32>, vector<16x128xf32> -> vector<16x128xf32>
    %c0_14 = arith.constant 0 : index
    %c0_15 = arith.constant 0 : index
    %23 = vector.load %arg7[%c0_14, %c0_15] : memref<8x128xf32, #tpu.memory_space<vmem>>, vector<8x128xf32>
    %cst_16 = arith.constant dense<0.000000e+00> : vector<16x128xf32>
    %24 = tpu.matmul %19, %23, %cst_16 {dimension_numbers = #tpu.dot_dimension_numbers<[1], [0], [0], [1], [0, 0, 1, 1], [], []>} : vector<16x8xf32>, vector<8x128xf32>, vector<16x128xf32> -> vector<16x128xf32>
    %25 = arith.addf %22, %24 : vector<16x128xf32>
    %c0_17 = arith.constant 0 : index
    %c0_18 = arith.constant 0 : index
    %26 = vector.load %arg8[%c0_17, %c0_18] : memref<1x128xf32, #tpu.memory_space<vmem>>, vector<1x128xf32>
    %27 = vector.broadcast %26 : vector<1x128xf32> to vector<16x128xf32>
    %28 = arith.addf %25, %27 : vector<16x128xf32>
    %cst_19 = arith.constant dense<0.000000e+00> : vector<8x128xf32>
    %29 = tpu.matmul %16, %28, %cst_19 {dimension_numbers = #tpu.dot_dimension_numbers<[1], [0], [0], [1], [0, 0, 1, 1], [], []>} : vector<8x16xf32>, vector<16x128xf32>, vector<8x128xf32> -> vector<8x128xf32>
    %30 = vector.broadcast %17 : vector<8x1xf32> to vector<8x128xf32>
    %31 = arith.mulf %29, %30 : vector<8x128xf32>
    %c0_20 = arith.constant 0 : index
    %c0_21 = arith.constant 0 : index
    %32 = vector.load %arg9[%c0_20, %c0_21] : memref<16x128xf32, #tpu.memory_space<vmem>>, vector<16x128xf32>
    %cst_22 = arith.constant dense<0.000000e+00> : vector<8x128xf32>
    %33 = tpu.matmul %18, %32, %cst_22 {dimension_numbers = #tpu.dot_dimension_numbers<[1], [0], [0], [1], [0, 0, 1, 1], [], []>} : vector<8x16xf32>, vector<16x128xf32>, vector<8x128xf32> -> vector<8x128xf32>
    %c0_23 = arith.constant 0 : index
    %c0_24 = arith.constant 0 : index
    %34 = vector.load %arg10[%c0_23, %c0_24] : memref<128x128xf32, #tpu.memory_space<vmem>>, vector<128x128xf32>
    %cst_25 = arith.constant dense<0.000000e+00> : vector<8x128xf32>
    %35 = tpu.matmul %31, %34, %cst_25 {dimension_numbers = #tpu.dot_dimension_numbers<[1], [0], [0], [1], [0, 0, 1, 1], [], []>} : vector<8x128xf32>, vector<128x128xf32>, vector<8x128xf32> -> vector<8x128xf32>
    %36 = arith.addf %33, %35 : vector<8x128xf32>
    %c0_26 = arith.constant 0 : index
    %c0_27 = arith.constant 0 : index
    %37 = vector.load %arg11[%c0_26, %c0_27] : memref<1x128xf32, #tpu.memory_space<vmem>>, vector<1x128xf32>
    %38 = vector.broadcast %37 : vector<1x128xf32> to vector<8x128xf32>
    %39 = arith.addf %36, %38 : vector<8x128xf32>
    %cst_28 = arith.constant 0.000000e+00 : f32
    %40 = vector.broadcast %cst_28 : f32 to vector<8x128xf32>
    %41 = arith.maximumf %39, %40 : vector<8x128xf32>
    %cst_29 = arith.constant dense<0.000000e+00> : vector<16x128xf32>
    %42 = tpu.matmul %6, %41, %cst_29 {dimension_numbers = #tpu.dot_dimension_numbers<[1], [0], [0], [1], [0, 0, 1, 1], [], []>} : vector<16x8xf32>, vector<8x128xf32>, vector<16x128xf32> -> vector<16x128xf32>
    %c0_30 = arith.constant 0 : index
    %c0_31 = arith.constant 0 : index
    %43 = vector.load %arg12[%c0_30, %c0_31] : memref<128x32xf32, #tpu.memory_space<vmem>>, vector<128x32xf32>
    %cst_32 = arith.constant dense<0.000000e+00> : vector<16x32xf32>
    %44 = tpu.matmul %42, %43, %cst_32 {dimension_numbers = #tpu.dot_dimension_numbers<[1], [0], [0], [1], [0, 0, 1, 1], [], []>} : vector<16x128xf32>, vector<128x32xf32>, vector<16x32xf32> -> vector<16x32xf32>
    %c0_33 = arith.constant 0 : index
    %c0_34 = arith.constant 0 : index
    %45 = vector.load %arg13[%c0_33, %c0_34] : memref<8x32xf32, #tpu.memory_space<vmem>>, vector<8x32xf32>
    %cst_35 = arith.constant dense<0.000000e+00> : vector<16x32xf32>
    %46 = tpu.matmul %19, %45, %cst_35 {dimension_numbers = #tpu.dot_dimension_numbers<[1], [0], [0], [1], [0, 0, 1, 1], [], []>} : vector<16x8xf32>, vector<8x32xf32>, vector<16x32xf32> -> vector<16x32xf32>
    %47 = arith.addf %44, %46 : vector<16x32xf32>
    %c0_36 = arith.constant 0 : index
    %c0_37 = arith.constant 0 : index
    %48 = vector.load %arg14[%c0_36, %c0_37] : memref<1x32xf32, #tpu.memory_space<vmem>>, vector<1x32xf32>
    %49 = vector.broadcast %48 : vector<1x32xf32> to vector<16x32xf32>
    %50 = arith.addf %47, %49 : vector<16x32xf32>
    %cst_38 = arith.constant dense<0.000000e+00> : vector<8x32xf32>
    %51 = tpu.matmul %16, %50, %cst_38 {dimension_numbers = #tpu.dot_dimension_numbers<[1], [0], [0], [1], [0, 0, 1, 1], [], []>} : vector<8x16xf32>, vector<16x32xf32>, vector<8x32xf32> -> vector<8x32xf32>
    %52 = vector.broadcast %17 : vector<8x1xf32> to vector<8x32xf32>
    %53 = arith.mulf %51, %52 : vector<8x32xf32>
    %c0_39 = arith.constant 0 : index
    %c0_40 = arith.constant 0 : index
    %54 = vector.load %arg15[%c0_39, %c0_40] : memref<128x32xf32, #tpu.memory_space<vmem>>, vector<128x32xf32>
    %cst_41 = arith.constant dense<0.000000e+00> : vector<8x32xf32>
    %55 = tpu.matmul %41, %54, %cst_41 {dimension_numbers = #tpu.dot_dimension_numbers<[1], [0], [0], [1], [0, 0, 1, 1], [], []>} : vector<8x128xf32>, vector<128x32xf32>, vector<8x32xf32> -> vector<8x32xf32>
    %c0_42 = arith.constant 0 : index
    %c0_43 = arith.constant 0 : index
    %56 = vector.load %arg16[%c0_42, %c0_43] : memref<32x32xf32, #tpu.memory_space<vmem>>, vector<32x32xf32>
    %cst_44 = arith.constant dense<0.000000e+00> : vector<8x32xf32>
    %57 = tpu.matmul %53, %56, %cst_44 {dimension_numbers = #tpu.dot_dimension_numbers<[1], [0], [0], [1], [0, 0, 1, 1], [], []>} : vector<8x32xf32>, vector<32x32xf32>, vector<8x32xf32> -> vector<8x32xf32>
    %58 = arith.addf %55, %57 : vector<8x32xf32>
    %c0_45 = arith.constant 0 : index
    %c0_46 = arith.constant 0 : index
    %59 = vector.load %arg17[%c0_45, %c0_46] : memref<1x32xf32, #tpu.memory_space<vmem>>, vector<1x32xf32>
    %60 = vector.broadcast %59 : vector<1x32xf32> to vector<8x32xf32>
    %61 = arith.addf %58, %60 : vector<8x32xf32>
    %cst_47 = arith.constant 0.000000e+00 : f32
    %62 = vector.broadcast %cst_47 : f32 to vector<8x32xf32>
    %63 = arith.maximumf %61, %62 : vector<8x32xf32>
    %cst_48 = arith.constant dense<0.000000e+00> : vector<16x32xf32>
    %64 = tpu.matmul %6, %63, %cst_48 {dimension_numbers = #tpu.dot_dimension_numbers<[1], [0], [0], [1], [0, 0, 1, 1], [], []>} : vector<16x8xf32>, vector<8x32xf32>, vector<16x32xf32> -> vector<16x32xf32>
    %cst_49 = arith.constant dense<0.000000e+00> : vector<16x32xf32>
    %65 = tpu.matmul %11, %63, %cst_49 {dimension_numbers = #tpu.dot_dimension_numbers<[1], [0], [0], [1], [0, 0, 1, 1], [], []>} : vector<16x8xf32>, vector<8x32xf32>, vector<16x32xf32> -> vector<16x32xf32>
    %c0_50 = arith.constant 0 : index
    %c0_51 = arith.constant 0 : index
    %66 = vector.load %arg18[%c0_50, %c0_51] : memref<32x128xf32, #tpu.memory_space<vmem>>, vector<32x128xf32>
    %cst_52 = arith.constant dense<0.000000e+00> : vector<16x128xf32>
    %67 = tpu.matmul %64, %66, %cst_52 {dimension_numbers = #tpu.dot_dimension_numbers<[1], [0], [0], [1], [0, 0, 1, 1], [], []>} : vector<16x32xf32>, vector<32x128xf32>, vector<16x128xf32> -> vector<16x128xf32>
    %c0_53 = arith.constant 0 : index
    %c0_54 = arith.constant 0 : index
    %68 = vector.load %arg19[%c0_53, %c0_54] : memref<32x128xf32, #tpu.memory_space<vmem>>, vector<32x128xf32>
    %cst_55 = arith.constant dense<0.000000e+00> : vector<16x128xf32>
    %69 = tpu.matmul %65, %68, %cst_55 {dimension_numbers = #tpu.dot_dimension_numbers<[1], [0], [0], [1], [0, 0, 1, 1], [], []>} : vector<16x32xf32>, vector<32x128xf32>, vector<16x128xf32> -> vector<16x128xf32>
    %70 = arith.addf %67, %69 : vector<16x128xf32>
    %c0_56 = arith.constant 0 : index
    %c0_57 = arith.constant 0 : index
    %71 = vector.load %arg20[%c0_56, %c0_57] : memref<1x128xf32, #tpu.memory_space<vmem>>, vector<1x128xf32>
    %72 = vector.broadcast %71 : vector<1x128xf32> to vector<16x128xf32>
    %73 = arith.addf %70, %72 : vector<16x128xf32>
    %c0_58 = arith.constant 0 : index
    %c0_59 = arith.constant 0 : index
    %74 = vector.load %arg21[%c0_58, %c0_59] : memref<16x128xf32, #tpu.memory_space<vmem>>, vector<16x128xf32>
    tpu.vector_store %arg21[%c0_58, %c0_59], %73 {strides = array<i32>} : memref<16x128xf32, #tpu.memory_space<vmem>>, vector<16x128xf32>,
    return
  }
}

</mosaic_0001>

<llo_original>
// kernel: tpu_custom_call.1
$region0: #{tpu_custom_call.1}
  #allocation0 [shape = 'u32[]', space=smem, size = 0x4, offset = 0x4, fixed_abs, tag = 'smem constant byte address 0x4 - core index']
  #allocation1 [shape = 'u32[144,128]{1,0:T(1,128)}', space=vmem, size = 0x12000, scoped, tag = 'internal scratch']
  %s0 = inlined_call_operand.hbm [shape: s32[16,1], index: 0, kind: input, shape index: {}]
  %s1 = inlined_call_operand.hbm [shape: s32[16,1], index: 1, kind: input, shape index: {}]
  %s2 = inlined_call_operand.hbm [shape: s32[1,16], index: 2, kind: input, shape index: {}]
  %s3 = inlined_call_operand.hbm [shape: f32[8,1], index: 3, kind: input, shape index: {}]
  %s4 = inlined_call_operand.hbm [shape: f32[8,16], index: 4, kind: input, shape index: {}]
  %s5 = inlined_call_operand.hbm [shape: f32[16,8], index: 5, kind: input, shape index: {}]
  %s6 = inlined_call_operand.hbm [shape: f32[16,128], index: 6, kind: input, shape index: {}]
  %s7 = inlined_call_operand.hbm [shape: f32[8,128], index: 7, kind: input, shape index: {}]
  %s8 = inlined_call_operand.hbm [shape: f32[1,128], index: 8, kind: input, shape index: {}]
  %s9 = inlined_call_operand.hbm [shape: f32[16,128], index: 9, kind: input, shape index: {}]
  %s10 = inlined_call_operand.hbm [shape: f32[128,128], index: 10, kind: input, shape index: {}]
  %s11 = inlined_call_operand.hbm [shape: f32[1,128], index: 11, kind: input, shape index: {}]
  %s12 = inlined_call_operand.hbm [shape: f32[128,32], index: 12, kind: input, shape index: {}]
  %s13 = inlined_call_operand.hbm [shape: f32[8,32], index: 13, kind: input, shape index: {}]
  %s14 = inlined_call_operand.hbm [shape: f32[1,32], index: 14, kind: input, shape index: {}]
  %s15 = inlined_call_operand.hbm [shape: f32[128,32], index: 15, kind: input, shape index: {}]
  %s16 = inlined_call_operand.hbm [shape: f32[32,32], index: 16, kind: input, shape index: {}]
  %s17 = inlined_call_operand.hbm [shape: f32[1,32], index: 17, kind: input, shape index: {}]
  %s18 = inlined_call_operand.hbm [shape: f32[32,128], index: 18, kind: input, shape index: {}]
  %s19 = inlined_call_operand.hbm [shape: f32[32,128], index: 19, kind: input, shape index: {}]
  %s20 = inlined_call_operand.hbm [shape: f32[1,128], index: 20, kind: input, shape index: {}]
  %s21 = inlined_call_operand.hbm [shape: f32[16,128], index: 21, kind: output, shape index: {}]
  %s22 = sld [smem:[#allocation0]]
  $region178: #{tpu_custom_call.1} parent=0
    _
  %s24 = ssub.s32 1, %s22
  %s25 = scalar_select 0, %s24, %s22
  $region1: #{tpu_custom_call.1} parent=0
    #allocation2 [shape = 'u8[8192]{0}', space=vmem, size = 0x2000, scoped, tag = 'input window, operand 0, single buffered']
    #allocation3 [shape = 's32[1]{0}', space=sflag, size = 0x4, scoped, tag = 'scoped memory for tpu_custom_call.1']
    #allocation4 [shape = 's32[1]{0}', space=sflag, size = 0x4, scoped, tag = 'scoped memory for tpu_custom_call.1']
    #allocation5 [shape = 'u8[8192]{0}', space=vmem, size = 0x2000, scoped, tag = 'input window, operand 1, single buffered']
    #allocation6 [shape = 's32[1]{0}', space=sflag, size = 0x4, scoped, tag = 'scoped memory for tpu_custom_call.1']
    #allocation7 [shape = 'u8[512]{0}', space=vmem, size = 0x400, scoped, tag = 'input window, operand 2, single buffered']
    #allocation8 [shape = 'u8[4096]{0}', space=vmem, size = 0x1000, scoped, tag = 'input window, operand 3, single buffered']
    #allocation9 [shape = 's32[1]{0}', space=sflag, size = 0x4, scoped, tag = 'scoped memory for tpu_custom_call.1']
    #allocation10 [shape = 'u8[4096]{0}', space=vmem, size = 0x1000, scoped, tag = 'input window, operand 4, single buffered']
    #allocation11 [shape = 'u8[8192]{0}', space=vmem, size = 0x2000, scoped, tag = 'input window, operand 5, single buffered']
    #allocation12 [shape = 's32[1]{0}', space=sflag, size = 0x4, scoped, tag = 'scoped memory for tpu_custom_call.1']
    #allocation13 [shape = 'u8[8192]{0}', space=vmem, size = 0x2000, scoped, tag = 'input window, operand 6, single buffered']
    #allocation14 [shape = 'u8[4096]{0}', space=vmem, size = 0x1000, scoped, tag = 'input window, operand 7, single buffered']
    #allocation15 [shape = 's32[1]{0}', space=sflag, size = 0x4, scoped, tag = 'scoped memory for tpu_custom_call.1']
    #allocation16 [shape = 'u8[512]{0}', space=vmem, size = 0x400, scoped, tag = 'input window, operand 8, single buffered']
    #allocation17 [shape = 'u8[8192]{0}', space=vmem, size = 0x2000, scoped, tag = 'input window, operand 9, single buffered']
    #allocation18 [shape = 's32[1]{0}', space=sflag, size = 0x4, scoped, tag = 'scoped memory for tpu_custom_call.1']
    #allocation19 [shape = 'u8[65536]{0}', space=vmem, size = 0x10000, scoped, tag = 'input window, operand 10, single buffered']
    #allocation20 [shape = 'u8[512]{0}', space=vmem, size = 0x400, scoped, tag = 'input window, operand 11, single buffered']
    #allocation21 [shape = 's32[1]{0}', space=sflag, size = 0x4, scoped, tag = 'scoped memory for tpu_custom_call.1']
    #allocation22 [shape = 'u8[65536]{0}', space=vmem, size = 0x10000, scoped, tag = 'input window, operand 12, single buffered']
    #allocation23 [shape = 'u8[4096]{0}', space=vmem, size = 0x1000, scoped, tag = 'input window, operand 13, single buffered']
    #allocation24 [shape = 's32[1]{0}', space=sflag, size = 0x4, scoped, tag = 'scoped memory for tpu_custom_call.1']
    #allocation25 [shape = 'u8[512]{0}', space=vmem, size = 0x400, scoped, tag = 'input window, operand 14, single buffered']
    #allocation26 [shape = 'u8[65536]{0}', space=vmem, size = 0x10000, scoped, tag = 'input window, operand 15, single buffered']
    #allocation27 [shape = 's32[1]{0}', space=sflag, size = 0x4, scoped, tag = 'scoped memory for tpu_custom_call.1']
    #allocation28 [shape = 'u8[16384]{0}', space=vmem, size = 0x4000, scoped, tag = 'input window, operand 16, single buffered']
    #allocation29 [shape = 'u8[512]{0}', space=vmem, size = 0x400, scoped, tag = 'input window, operand 17, single buffered']
    #allocation30 [shape = 's32[1]{0}', space=sflag, size = 0x4, scoped, tag = 'scoped memory for tpu_custom_call.1']
    #allocation31 [shape = 'u8[16384]{0}', space=vmem, size = 0x4000, scoped, tag = 'input window, operand 18, single buffered']
    #allocation32 [shape = 'u8[16384]{0}', space=vmem, size = 0x4000, scoped, tag = 'input window, operand 19, single buffered']
    #allocation33 [shape = 's32[1]{0}', space=sflag, size = 0x4, scoped, tag = 'scoped memory for tpu_custom_call.1']
    #allocation34 [shape = 'u8[512]{0}', space=vmem, size = 0x400, scoped, tag = 'input window, operand 20, single buffered']
    #allocation35 [shape = 'u8[8192]{0}', space=vmem, size = 0x2000, scoped, tag = 'output window, operand 0, single buffered']
    %26 = vsyncpa [#allocation3], 0
    %27 = vsyncpa [#allocation6], 0
    %28 = vsyncpa [#allocation9], 0
    %29 = vsyncpa [#allocation12], 0
    %30 = vsyncpa [#allocation15], 0
    %31 = vsyncpa [#allocation18], 0
    %32 = vsyncpa [#allocation21], 0
    %33 = vsyncpa [#allocation24], 0
    %34 = vsyncpa [#allocation27], 0
    %35 = vsyncpa [#allocation30], 0
    %36 = vsyncpa [#allocation33], 0
    %37 = vsyncpa [#allocation4], 0
    // Predicated region
    $region2: #{tpu_custom_call.1} parent=1 // pred_check
      _
    $region3: #{tpu_custom_call.1} parent=1 // pred_check_branch
      %39 = sbr.rel (0) target = $region5
    $region4: #{tpu_custom_call.1} parent=1 // pred_region
      %s41 = ssub.s32 256, 256
      %42 = vsyncadd [#allocation3], %s41
      %s43 = sshll.u32 [#allocation2], 4
      %s44 = int_to_ptr.vmem [resolvable:$true] %s43
      %49 = dma.hbm_to_vmem [thread:$0]  %s0, 256, %s44, [#allocation3], 128, 128, 8
    $region5: #{tpu_custom_call.1} parent=1 // pred_fallthru
      _
    // Predicated region
    $region6: #{tpu_custom_call.1} parent=1 // pred_check
      _
    $region7: #{tpu_custom_call.1} parent=1 // pred_check_branch
      %51 = sbr.rel (0) target = $region9
    $region8: #{tpu_custom_call.1} parent=1 // pred_region
      %s53 = ssub.s32 256, 256
      %54 = vsyncadd [#allocation6], %s53
      %s55 = sshll.u32 [#allocation5], 4
      %s56 = int_to_ptr.vmem [resolvable:$true] %s55
      %61 = dma.hbm_to_vmem [thread:$0]  %s1, 256, %s56, [#allocation6], 128, 128, 8
    $region9: #{tpu_custom_call.1} parent=1 // pred_fallthru
      _
    // Predicated region
    $region10: #{tpu_custom_call.1} parent=1 // pred_check
      _
    $region11: #{tpu_custom_call.1} parent=1 // pred_check_branch
      %63 = sbr.rel (0) target = $region13
    $region12: #{tpu_custom_call.1} parent=1 // pred_region
      %s65 = ssub.s32 16, 16
      %66 = vsyncadd [#allocation6], %s65
      %s68 = sshll.u32 [#allocation7], 4
      %s69 = int_to_ptr.vmem [resolvable:$true] %s68
      %71 = dma.hbm_to_vmem [thread:$0]  %s2, 16, %s69, [#allocation6]
    $region13: #{tpu_custom_call.1} parent=1 // pred_fallthru
      _
    // Predicated region
    $region14: #{tpu_custom_call.1} parent=1 // pred_check
      _
    $region15: #{tpu_custom_call.1} parent=1 // pred_check_branch
      %73 = sbr.rel (0) target = $region17
    $region16: #{tpu_custom_call.1} parent=1 // pred_region
      %s75 = ssub.s32 128, 128
      %76 = vsyncadd [#allocation9], %s75
      %s78 = sshll.u32 [#allocation8], 4
      %s79 = int_to_ptr.vmem [resolvable:$true] %s78
      %81 = dma.hbm_to_vmem [thread:$0]  %s3, 128, %s79, [#allocation9]
    $region17: #{tpu_custom_call.1} parent=1 // pred_fallthru
      _
    // Predicated region
    $region18: #{tpu_custom_call.1} parent=1 // pred_check
      _
    $region19: #{tpu_custom_call.1} parent=1 // pred_check_branch
      %83 = sbr.rel (0) target = $region21
    $region20: #{tpu_custom_call.1} parent=1 // pred_region
      %s85 = ssub.s32 128, 128
      %86 = vsyncadd [#allocation9], %s85
      %s88 = sshll.u32 [#allocation10], 4
      %s89 = int_to_ptr.vmem [resolvable:$true] %s88
      %91 = dma.hbm_to_vmem [thread:$0]  %s4, 128, %s89, [#allocation9]
    $region21: #{tpu_custom_call.1} parent=1 // pred_fallthru
      _
    // Predicated region
    $region22: #{tpu_custom_call.1} parent=1 // pred_check
      _
    $region23: #{tpu_custom_call.1} parent=1 // pred_check_branch
      %93 = sbr.rel (0) target = $region25
    $region24: #{tpu_custom_call.1} parent=1 // pred_region
      %s95 = ssub.s32 256, 256
      %96 = vsyncadd [#allocation12], %s95
      %s97 = sshll.u32 [#allocation11], 4
      %s98 = int_to_ptr.vmem [resolvable:$true] %s97
      %103 = dma.hbm_to_vmem [thread:$0]  %s5, 256, %s98, [#allocation12], 128, 128, 8
    $region25: #{tpu_custom_call.1} parent=1 // pred_fallthru
      _
    // Predicated region
    $region26: #{tpu_custom_call.1} parent=1 // pred_check
      _
    $region27: #{tpu_custom_call.1} parent=1 // pred_check_branch
      %105 = sbr.rel (0) target = $region29
    $region28: #{tpu_custom_call.1} parent=1 // pred_region
      %s107 = ssub.s32 256, 256
      %108 = vsyncadd [#allocation12], %s107
      %s109 = sshll.u32 [#allocation13], 4
      %s110 = int_to_ptr.vmem [resolvable:$true] %s109
      %115 = dma.hbm_to_vmem [thread:$0]  %s6, 256, %s110, [#allocation12], 128, 128, 8
    $region29: #{tpu_custom_call.1} parent=1 // pred_fallthru
      _
    // Predicated region
    $region30: #{tpu_custom_call.1} parent=1 // pred_check
      _
    $region31: #{tpu_custom_call.1} parent=1 // pred_check_branch
      %117 = sbr.rel (0) target = $region33
    $region32: #{tpu_custom_call.1} parent=1 // pred_region
      %s119 = ssub.s32 128, 128
      %120 = vsyncadd [#allocation15], %s119
      %s122 = sshll.u32 [#allocation14], 4
      %s123 = int_to_ptr.vmem [resolvable:$true] %s122
      %125 = dma.hbm_to_vmem [thread:$0]  %s7, 128, %s123, [#allocation15]
    $region33: #{tpu_custom_call.1} parent=1 // pred_fallthru
      _
    // Predicated region
    $region34: #{tpu_custom_call.1} parent=1 // pred_check
      _
    $region35: #{tpu_custom_call.1} parent=1 // pred_check_branch
      %127 = sbr.rel (0) target = $region37
    $region36: #{tpu_custom_call.1} parent=1 // pred_region
      %s129 = ssub.s32 16, 16
      %130 = vsyncadd [#allocation15], %s129
      %s132 = sshll.u32 [#allocation16], 4
      %s133 = int_to_ptr.vmem [resolvable:$true] %s132
      %135 = dma.hbm_to_vmem [thread:$0]  %s8, 16, %s133, [#allocation15]
    $region37: #{tpu_custom_call.1} parent=1 // pred_fallthru
      _
    // Predicated region
    $region38: #{tpu_custom_call.1} parent=1 // pred_check
      _
    $region39: #{tpu_custom_call.1} parent=1 // pred_check_branch
      %137 = sbr.rel (0) target = $region41
    $region40: #{tpu_custom_call.1} parent=1 // pred_region
      %s139 = ssub.s32 256, 256
      %140 = vsyncadd [#allocation18], %s139
      %s141 = sshll.u32 [#allocation17], 4
      %s142 = int_to_ptr.vmem [resolvable:$true] %s141
      %147 = dma.hbm_to_vmem [thread:$0]  %s9, 256, %s142, [#allocation18], 128, 128, 8
    $region41: #{tpu_custom_call.1} parent=1 // pred_fallthru
      _
    // Predicated region
    $region42: #{tpu_custom_call.1} parent=1 // pred_check
      _
    $region43: #{tpu_custom_call.1} parent=1 // pred_check_branch
      %149 = sbr.rel (0) target = $region45
    $region44: #{tpu_custom_call.1} parent=1 // pred_region
      %s151 = ssub.s32 2048, 2048
      %152 = vsyncadd [#allocation18], %s151
      %s153 = sshll.u32 [#allocation19], 4
      %s154 = int_to_ptr.vmem [resolvable:$true] %s153
      %159 = dma.hbm_to_vmem [thread:$0]  %s10, 2048, %s154, [#allocation18], 128, 128, 8
    $region45: #{tpu_custom_call.1} parent=1 // pred_fallthru
      _
    // Predicated region
    $region46: #{tpu_custom_call.1} parent=1 // pred_check
      _
    $region47: #{tpu_custom_call.1} parent=1 // pred_check_branch
      %161 = sbr.rel (0) target = $region49
    $region48: #{tpu_custom_call.1} parent=1 // pred_region
      %s163 = ssub.s32 16, 16
      %164 = vsyncadd [#allocation21], %s163
      %s166 = sshll.u32 [#allocation20], 4
      %s167 = int_to_ptr.vmem [resolvable:$true] %s166
      %169 = dma.hbm_to_vmem [thread:$0]  %s11, 16, %s167, [#allocation21]
    $region49: #{tpu_custom_call.1} parent=1 // pred_fallthru
      _
    // Predicated region
    $region50: #{tpu_custom_call.1} parent=1 // pred_check
      _
    $region51: #{tpu_custom_call.1} parent=1 // pred_check_branch
      %171 = sbr.rel (0) target = $region53
    $region52: #{tpu_custom_call.1} parent=1 // pred_region
      %s173 = ssub.s32 2048, 2048
      %174 = vsyncadd [#allocation21], %s173
      %s175 = sshll.u32 [#allocation22], 4
      %s176 = int_to_ptr.vmem [resolvable:$true] %s175
      %181 = dma.hbm_to_vmem [thread:$0]  %s12, 2048, %s176, [#allocation21], 128, 128, 8
    $region53: #{tpu_custom_call.1} parent=1 // pred_fallthru
      _
    // Predicated region
    $region54: #{tpu_custom_call.1} parent=1 // pred_check
      _
    $region55: #{tpu_custom_call.1} parent=1 // pred_check_branch
      %183 = sbr.rel (0) target = $region57
    $region56: #{tpu_custom_call.1} parent=1 // pred_region
      %s185 = ssub.s32 128, 128
      %186 = vsyncadd [#allocation24], %s185
      %s188 = sshll.u32 [#allocation23], 4
      %s189 = int_to_ptr.vmem [resolvable:$true] %s188
      %191 = dma.hbm_to_vmem [thread:$0]  %s13, 128, %s189, [#allocation24]
    $region57: #{tpu_custom_call.1} parent=1 // pred_fallthru
      _
    // Predicated region
    $region58: #{tpu_custom_call.1} parent=1 // pred_check
      _
    $region59: #{tpu_custom_call.1} parent=1 // pred_check_branch
      %193 = sbr.rel (0) target = $region61
    $region60: #{tpu_custom_call.1} parent=1 // pred_region
      %s195 = ssub.s32 16, 16
      %196 = vsyncadd [#allocation24], %s195
      %s198 = sshll.u32 [#allocation25], 4
      %s199 = int_to_ptr.vmem [resolvable:$true] %s198
      %201 = dma.hbm_to_vmem [thread:$0]  %s14, 16, %s199, [#allocation24]
    $region61: #{tpu_custom_call.1} parent=1 // pred_fallthru
      _
    // Predicated region
    $region62: #{tpu_custom_call.1} parent=1 // pred_check
      _
    $region63: #{tpu_custom_call.1} parent=1 // pred_check_branch
      %203 = sbr.rel (0) target = $region65
    $region64: #{tpu_custom_call.1} parent=1 // pred_region
      %s205 = ssub.s32 2048, 2048
      %206 = vsyncadd [#allocation27], %s205
      %s207 = sshll.u32 [#allocation26], 4
      %s208 = int_to_ptr.vmem [resolvable:$true] %s207
      %213 = dma.hbm_to_vmem [thread:$0]  %s15, 2048, %s208, [#allocation27], 128, 128, 8
    $region65: #{tpu_custom_call.1} parent=1 // pred_fallthru
      _
    // Predicated region
    $region66: #{tpu_custom_call.1} parent=1 // pred_check
      _
    $region67: #{tpu_custom_call.1} parent=1 // pred_check_branch
      %215 = sbr.rel (0) target = $region69
    $region68: #{tpu_custom_call.1} parent=1 // pred_region
      %s217 = ssub.s32 512, 512
      %218 = vsyncadd [#allocation27], %s217
      %s219 = sshll.u32 [#allocation28], 4
      %s220 = int_to_ptr.vmem [resolvable:$true] %s219
      %225 = dma.hbm_to_vmem [thread:$0]  %s16, 512, %s220, [#allocation27], 128, 128, 8
    $region69: #{tpu_custom_call.1} parent=1 // pred_fallthru
      _
    // Predicated region
    $region70: #{tpu_custom_call.1} parent=1 // pred_check
      _
    $region71: #{tpu_custom_call.1} parent=1 // pred_check_branch
      %227 = sbr.rel (0) target = $region73
    $region72: #{tpu_custom_call.1} parent=1 // pred_region
      %s229 = ssub.s32 16, 16
      %230 = vsyncadd [#allocation30], %s229
      %s232 = sshll.u32 [#allocation29], 4
      %s233 = int_to_ptr.vmem [resolvable:$true] %s232
      %235 = dma.hbm_to_vmem [thread:$0]  %s17, 16, %s233, [#allocation30]
    $region73: #{tpu_custom_call.1} parent=1 // pred_fallthru
      _
    // Predicated region
    $region74: #{tpu_custom_call.1} parent=1 // pred_check
      _
    $region75: #{tpu_custom_call.1} parent=1 // pred_check_branch
      %237 = sbr.rel (0) target = $region77
    $region76: #{tpu_custom_call.1} parent=1 // pred_region
      %s239 = ssub.s32 512, 512
      %240 = vsyncadd [#allocation30], %s239
      %s241 = sshll.u32 [#allocation31], 4
      %s242 = int_to_ptr.vmem [resolvable:$true] %s241
      %247 = dma.hbm_to_vmem [thread:$0]  %s18, 512, %s242, [#allocation30], 128, 128, 8
    $region77: #{tpu_custom_call.1} parent=1 // pred_fallthru
      _
    // Predicated region
    $region78: #{tpu_custom_call.1} parent=1 // pred_check
      _
    $region79: #{tpu_custom_call.1} parent=1 // pred_check_branch
      %249 = sbr.rel (0) target = $region81
    $region80: #{tpu_custom_call.1} parent=1 // pred_region
      %s251 = ssub.s32 512, 512
      %252 = vsyncadd [#allocation33], %s251
      %s253 = sshll.u32 [#allocation32], 4
      %s254 = int_to_ptr.vmem [resolvable:$true] %s253
      %259 = dma.hbm_to_vmem [thread:$0]  %s19, 512, %s254, [#allocation33], 128, 128, 8
    $region81: #{tpu_custom_call.1} parent=1 // pred_fallthru
      _
    // Predicated region
    $region82: #{tpu_custom_call.1} parent=1 // pred_check
      _
    $region83: #{tpu_custom_call.1} parent=1 // pred_check_branch
      %261 = sbr.rel (0) target = $region85
    $region84: #{tpu_custom_call.1} parent=1 // pred_region
      %s263 = ssub.s32 16, 16
      %264 = vsyncadd [#allocation33], %s263
      %s266 = sshll.u32 [#allocation34], 4
      %s267 = int_to_ptr.vmem [resolvable:$true] %s266
      %269 = dma.hbm_to_vmem [thread:$0]  %s20, 16, %s267, [#allocation33]
    $region85: #{tpu_custom_call.1} parent=1 // pred_fallthru
      _
    // Predicated region
    $region86: #{tpu_custom_call.1} parent=1 // pred_check
      _
    $region87: #{tpu_custom_call.1} parent=1 // pred_check_branch
      %271 = sbr.rel (0) target = $region89
    $region88: #{tpu_custom_call.1} parent=1 // pred_region
      %272 = dma.done [#allocation3], 256
    $region89: #{tpu_custom_call.1} parent=1 // pred_fallthru
      _
    // Predicated region
    $region90: #{tpu_custom_call.1} parent=1 // pred_check
      _
    $region91: #{tpu_custom_call.1} parent=1 // pred_check_branch
      %274 = sbr.rel (0) target = $region93
    $region92: #{tpu_custom_call.1} parent=1 // pred_region
      %275 = dma.done [#allocation6], 256
    $region93: #{tpu_custom_call.1} parent=1 // pred_fallthru
      _
    // Predicated region
    $region94: #{tpu_custom_call.1} parent=1 // pred_check
      _
    $region95: #{tpu_custom_call.1} parent=1 // pred_check_branch
      %277 = sbr.rel (0) target = $region97
    $region96: #{tpu_custom_call.1} parent=1 // pred_region
      %278 = dma.done [#allocation6], 16
    $region97: #{tpu_custom_call.1} parent=1 // pred_fallthru
      _
    // Predicated region
    $region98: #{tpu_custom_call.1} parent=1 // pred_check
      _
    $region99: #{tpu_custom_call.1} parent=1 // pred_check_branch
      %280 = sbr.rel (0) target = $region101
    $region100: #{tpu_custom_call.1} parent=1 // pred_region
      %281 = dma.done [#allocation9], 128
    $region101: #{tpu_custom_call.1} parent=1 // pred_fallthru
      _
    // Predicated region
    $region102: #{tpu_custom_call.1} parent=1 // pred_check
      _
    $region103: #{tpu_custom_call.1} parent=1 // pred_check_branch
      %283 = sbr.rel (0) target = $region105
    $region104: #{tpu_custom_call.1} parent=1 // pred_region
      %284 = dma.done [#allocation9], 128
    $region105: #{tpu_custom_call.1} parent=1 // pred_fallthru
      _
    // Predicated region
    $region106: #{tpu_custom_call.1} parent=1 // pred_check
      _
    $region107: #{tpu_custom_call.1} parent=1 // pred_check_branch
      %286 = sbr.rel (0) target = $region109
    $region108: #{tpu_custom_call.1} parent=1 // pred_region
      %287 = dma.done [#allocation12], 256
    $region109: #{tpu_custom_call.1} parent=1 // pred_fallthru
      _
    // Predicated region
    $region110: #{tpu_custom_call.1} parent=1 // pred_check
      _
    $region111: #{tpu_custom_call.1} parent=1 // pred_check_branch
      %289 = sbr.rel (0) target = $region113
    $region112: #{tpu_custom_call.1} parent=1 // pred_region
      %290 = dma.done [#allocation12], 256
    $region113: #{tpu_custom_call.1} parent=1 // pred_fallthru
      _
    // Predicated region
    $region114: #{tpu_custom_call.1} parent=1 // pred_check
      _
    $region115: #{tpu_custom_call.1} parent=1 // pred_check_branch
      %292 = sbr.rel (0) target = $region117
    $region116: #{tpu_custom_call.1} parent=1 // pred_region
      %293 = dma.done [#allocation15], 128
    $region117: #{tpu_custom_call.1} parent=1 // pred_fallthru
      _
    // Predicated region
    $region118: #{tpu_custom_call.1} parent=1 // pred_check
      _
    $region119: #{tpu_custom_call.1} parent=1 // pred_check_branch
      %295 = sbr.rel (0) target = $region121
    $region120: #{tpu_custom_call.1} parent=1 // pred_region
      %296 = dma.done [#allocation15], 16
    $region121: #{tpu_custom_call.1} parent=1 // pred_fallthru
      _
    // Predicated region
    $region122: #{tpu_custom_call.1} parent=1 // pred_check
      _
    $region123: #{tpu_custom_call.1} parent=1 // pred_check_branch
      %298 = sbr.rel (0) target = $region125
    $region124: #{tpu_custom_call.1} parent=1 // pred_region
      %299 = dma.done [#allocation18], 256
    $region125: #{tpu_custom_call.1} parent=1 // pred_fallthru
      _
    // Predicated region
    $region126: #{tpu_custom_call.1} parent=1 // pred_check
      _
    $region127: #{tpu_custom_call.1} parent=1 // pred_check_branch
      %301 = sbr.rel (0) target = $region129
    $region128: #{tpu_custom_call.1} parent=1 // pred_region
      %302 = dma.done [#allocation18], 2048
    $region129: #{tpu_custom_call.1} parent=1 // pred_fallthru
      _
    // Predicated region
    $region130: #{tpu_custom_call.1} parent=1 // pred_check
      _
    $region131: #{tpu_custom_call.1} parent=1 // pred_check_branch
      %304 = sbr.rel (0) target = $region133
    $region132: #{tpu_custom_call.1} parent=1 // pred_region
      %305 = dma.done [#allocation21], 16
    $region133: #{tpu_custom_call.1} parent=1 // pred_fallthru
      _
    // Predicated region
    $region134: #{tpu_custom_call.1} parent=1 // pred_check
      _
    $region135: #{tpu_custom_call.1} parent=1 // pred_check_branch
      %307 = sbr.rel (0) target = $region137
    $region136: #{tpu_custom_call.1} parent=1 // pred_region
      %308 = dma.done [#allocation21], 2048
    $region137: #{tpu_custom_call.1} parent=1 // pred_fallthru
      _
    // Predicated region
    $region138: #{tpu_custom_call.1} parent=1 // pred_check
      _
    $region139: #{tpu_custom_call.1} parent=1 // pred_check_branch
      %310 = sbr.rel (0) target = $region141
    $region140: #{tpu_custom_call.1} parent=1 // pred_region
      %311 = dma.done [#allocation24], 128
    $region141: #{tpu_custom_call.1} parent=1 // pred_fallthru
      _
    // Predicated region
    $region142: #{tpu_custom_call.1} parent=1 // pred_check
      _
    $region143: #{tpu_custom_call.1} parent=1 // pred_check_branch
      %313 = sbr.rel (0) target = $region145
    $region144: #{tpu_custom_call.1} parent=1 // pred_region
      %314 = dma.done [#allocation24], 16
    $region145: #{tpu_custom_call.1} parent=1 // pred_fallthru
      _
    // Predicated region
    $region146: #{tpu_custom_call.1} parent=1 // pred_check
      _
    $region147: #{tpu_custom_call.1} parent=1 // pred_check_branch
      %316 = sbr.rel (0) target = $region149
    $region148: #{tpu_custom_call.1} parent=1 // pred_region
      %317 = dma.done [#allocation27], 2048
    $region149: #{tpu_custom_call.1} parent=1 // pred_fallthru
      _
    // Predicated region
    $region150: #{tpu_custom_call.1} parent=1 // pred_check
      _
    $region151: #{tpu_custom_call.1} parent=1 // pred_check_branch
      %319 = sbr.rel (0) target = $region153
    $region152: #{tpu_custom_call.1} parent=1 // pred_region
      %320 = dma.done [#allocation27], 512
    $region153: #{tpu_custom_call.1} parent=1 // pred_fallthru
      _
    // Predicated region
    $region154: #{tpu_custom_call.1} parent=1 // pred_check
      _
    $region155: #{tpu_custom_call.1} parent=1 // pred_check_branch
      %322 = sbr.rel (0) target = $region157
    $region156: #{tpu_custom_call.1} parent=1 // pred_region
      %323 = dma.done [#allocation30], 16
    $region157: #{tpu_custom_call.1} parent=1 // pred_fallthru
      _
    // Predicated region
    $region158: #{tpu_custom_call.1} parent=1 // pred_check
      _
    $region159: #{tpu_custom_call.1} parent=1 // pred_check_branch
      %325 = sbr.rel (0) target = $region161
    $region160: #{tpu_custom_call.1} parent=1 // pred_region
      %326 = dma.done [#allocation30], 512
    $region161: #{tpu_custom_call.1} parent=1 // pred_fallthru
      _
    // Predicated region
    $region162: #{tpu_custom_call.1} parent=1 // pred_check
      _
    $region163: #{tpu_custom_call.1} parent=1 // pred_check_branch
      %328 = sbr.rel (0) target = $region165
    $region164: #{tpu_custom_call.1} parent=1 // pred_region
      %329 = dma.done [#allocation33], 512
    $region165: #{tpu_custom_call.1} parent=1 // pred_fallthru
      _
    // Predicated region
    $region166: #{tpu_custom_call.1} parent=1 // pred_check
      _
    $region167: #{tpu_custom_call.1} parent=1 // pred_check_branch
      %331 = sbr.rel (0) target = $region169
    $region168: #{tpu_custom_call.1} parent=1 // pred_region
      %332 = dma.done [#allocation33], 16
    $region169: #{tpu_custom_call.1} parent=1 // pred_fallthru
      _
    %v333 = vlaneseq
    %v334 = vand.u32 %v333, 127
    %v335 = vlaneseq
    %v336 = vshrl.u32 %v335, 7
    %v337 = vld [vmem:[#allocation2] sm:$0xff]
    %v338 = vld [vmem:[#allocation2 + $0x8] sm:$0xff]
    %339 = vset.pattern.permute.xlu0 0
    %340 = vperm.xlu0 %339, %v337
    %v341 = vpop.permute.xlu0 %340
    %342 = vset.pattern.permute.xlu0 0
    %343 = vperm.xlu0 %342, %v338
    %v344 = vpop.permute.xlu0 %343
    %vm345 = vcmp.eq.s32.totalorder %v334, %v341
    %vm346 = vcmp.eq.s32.totalorder %v334, %v344
    %v347 = vsel %vm345, 1, 0
    %v348 = vsel %vm346, 1, 0
    %v349 = vcvt.s32.f32 %v347
    %v350 = vcvt.s32.f32 %v348
    %v351 = vld [vmem:[#allocation5] sm:$0xff]
    %v352 = vld [vmem:[#allocation5 + $0x8] sm:$0xff]
    %353 = vset.pattern.permute.xlu0 0
    %354 = vperm.xlu0 %353, %v351
    %v355 = vpop.permute.xlu0 %354
    %356 = vset.pattern.permute.xlu0 0
    %357 = vperm.xlu0 %356, %v352
    %v358 = vpop.permute.xlu0 %357
    %vm359 = vcmp.eq.s32.totalorder %v334, %v355
    %vm360 = vcmp.eq.s32.totalorder %v334, %v358
    %v361 = vsel %vm359, 1, 0
    %v362 = vsel %vm360, 1, 0
    %v363 = vcvt.s32.f32 %v361
    %v364 = vcvt.s32.f32 %v362
    %v365 = vld [vmem:[#allocation7] sm:$0x1]
    %v366 = vlaneseq
    %v367 = vshrl.u32 %v366, 7
    %v368 = vsub.s32 0, %v367
    %v369 = vrot.slane %v365, %v368
    %vm370 = vcmp.eq.s32.totalorder %v336, %v369
    %v371 = vsel %vm370, 1, 0
    %v372 = vcvt.s32.f32 %v371
    %v373 = vld [vmem:[#allocation8] sm:$0xff]
    %v374 = vld [vmem:[#allocation10] sm:$0xff]
    %v375 = vld [vmem:[#allocation11] sm:$0xff]
    %v376 = vld [vmem:[#allocation11 + $0x8] sm:$0xff]
    %vm377 = vcmask 64512
    %v379 = vsel %vm377, %v349, 0
    %v382 = vsel %vm377, %v350, 0
    %384 = vmatprep.subr.mxu0 0.0
    %385 = vmatpush1.msra.mxu0 %v374
    %386 = vmatprep.subr.mxu0 0.0
    %387 = vmatpush1.msra.mxu0 0.0
    %388 = vmatprep.subr.mxu0 0.0
    %389 = vmatpush1.msra.mxu0 0.0
    %390 = vmatprep.subr.mxu0 0.0
    %391 = vmatpush1.msra.mxu0 0.0
    %392 = vmatprep.subr.mxu0 0.0
    %393 = vmatpush1.msra.mxu0 0.0
    %394 = vmatprep.subr.mxu0 0.0
    %395 = vmatpush1.msra.mxu0 0.0
    %396 = vmatprep.subr.mxu0 0.0
    %397 = vmatpush1.msra.mxu0 0.0
    %398 = vmatprep.subr.mxu0 0.0
    %399 = vmatpush1.msra.mxu0 0.0
    %400 = vmatprep.subr.mxu0 0.0
    %401 = vmatpush1.msra.mxu0 0.0
    %402 = vmatprep.subr.mxu0 0.0
    %403 = vmatpush1.msra.mxu0 0.0
    %404 = vmatprep.subr.mxu0 0.0
    %405 = vmatpush1.msra.mxu0 0.0
    %406 = vmatprep.subr.mxu0 0.0
    %407 = vmatpush1.msra.mxu0 0.0
    %408 = vmatprep.subr.mxu0 0.0
    %409 = vmatpush1.msra.mxu0 0.0
    %410 = vmatprep.subr.mxu0 0.0
    %411 = vmatpush1.msra.mxu0 0.0
    %412 = vmatprep.subr.mxu0 0.0
    %413 = vmatpush1.msra.mxu0 0.0
    %414 = vmatprep.subr.mxu0 0.0
    %415 = vmatpush1.msra.mxu0 0.0
    %416 = vmatprep.subr.mxu0 0.0
    %417 = vmatpush1.msra.mxu0 0.0
    %418 = vmatprep.subr.mxu0 0.0
    %419 = vmatpush1.msra.mxu0 0.0
    %420 = vmatprep.subr.mxu0 0.0
    %421 = vmatpush1.msra.mxu0 0.0
    %422 = vmatprep.subr.mxu0 0.0
    %423 = vmatpush1.msra.mxu0 0.0
    %424 = vmatprep.subr.mxu0 0.0
    %425 = vmatpush1.msra.mxu0 0.0
    %426 = vmatprep.subr.mxu0 0.0
    %427 = vmatpush1.msra.mxu0 0.0
    %428 = vmatprep.subr.mxu0 0.0
    %429 = vmatpush1.msra.mxu0 0.0
    %430 = vmatprep.subr.mxu0 0.0
    %431 = vmatpush1.msra.mxu0 0.0
    %432 = vmatprep.subr.mxu0 0.0
    %433 = vmatpush1.msra.mxu0 0.0
    %434 = vmatprep.subr.mxu0 0.0
    %435 = vmatpush1.msra.mxu0 0.0
    %436 = vmatprep.subr.mxu0 0.0
    %437 = vmatpush1.msra.mxu0 0.0
    %438 = vmatprep.subr.mxu0 0.0
    %439 = vmatpush1.msra.mxu0 0.0
    %440 = vmatprep.subr.mxu0 0.0
    %441 = vmatpush1.msra.mxu0 0.0
    %442 = vmatprep.subr.mxu0 0.0
    %443 = vmatpush1.msra.mxu0 0.0
    %444 = vmatprep.subr.mxu0 0.0
    %445 = vmatpush1.msra.mxu0 0.0
    %446 = vmatprep.subr.mxu0 0.0
    %447 = vmatpush1.msra.mxu0 0.0
    %448 = vmatprep.mubr.f32.mxu0 0.0
    %449 = vmatmul.mubr.f32.gmra.mrb[0].mxu0 %v379
    %v450 = vpop.f32.mrb[0].mxu0
    %v451 = vadd.f32 0.0, %v450
    %v452 = vpop.f32.mrb[0].mxu0
    %453 = vmatprep.mubr.f32.mxu0 0.0
    %454 = vmatmul.mubr.f32.gmra.mrb[0].mxu0 %v382
    %v455 = vpop.f32.mrb[0].mxu0
    %v456 = vadd.f32 0.0, %v455
    %v457 = vpop.f32.mrb[0].mxu0
    %458 = vdwg.mxu0
    %v459 = vld [vmem:[#allocation13] sm:$0xff]
    %v460 = vld [vmem:[#allocation13 + $0x8] sm:$0xff]
    %v461 = vld [vmem:[#allocation14] sm:$0xff]
    %v463 = vsel %vm377, %v375, 0
    %v466 = vsel %vm377, %v376, 0
    %468 = vmatprep.subr.mxu0 0.0
    %469 = vmatpush1.msra.mxu0 %v461
    %470 = vmatprep.subr.mxu0 0.0
    %471 = vmatpush1.msra.mxu0 0.0
    %472 = vmatprep.subr.mxu0 0.0
    %473 = vmatpush1.msra.mxu0 0.0
    %474 = vmatprep.subr.mxu0 0.0
    %475 = vmatpush1.msra.mxu0 0.0
    %476 = vmatprep.subr.mxu0 0.0
    %477 = vmatpush1.msra.mxu0 0.0
    %478 = vmatprep.subr.mxu0 0.0
    %479 = vmatpush1.msra.mxu0 0.0
    %480 = vmatprep.subr.mxu0 0.0
    %481 = vmatpush1.msra.mxu0 0.0
    %482 = vmatprep.subr.mxu0 0.0
    %483 = vmatpush1.msra.mxu0 0.0
    %484 = vmatprep.subr.mxu0 0.0
    %485 = vmatpush1.msra.mxu0 0.0
    %486 = vmatprep.subr.mxu0 0.0
    %487 = vmatpush1.msra.mxu0 0.0
    %488 = vmatprep.subr.mxu0 0.0
    %489 = vmatpush1.msra.mxu0 0.0
    %490 = vmatprep.subr.mxu0 0.0
    %491 = vmatpush1.msra.mxu0 0.0
    %492 = vmatprep.subr.mxu0 0.0
    %493 = vmatpush1.msra.mxu0 0.0
    %494 = vmatprep.subr.mxu0 0.0
    %495 = vmatpush1.msra.mxu0 0.0
    %496 = vmatprep.subr.mxu0 0.0
    %497 = vmatpush1.msra.mxu0 0.0
    %498 = vmatprep.subr.mxu0 0.0
    %499 = vmatpush1.msra.mxu0 0.0
    %500 = vmatprep.subr.mxu0 0.0
    %501 = vmatpush1.msra.mxu0 0.0
    %502 = vmatprep.subr.mxu0 0.0
    %503 = vmatpush1.msra.mxu0 0.0
    %504 = vmatprep.subr.mxu0 0.0
    %505 = vmatpush1.msra.mxu0 0.0
    %506 = vmatprep.subr.mxu0 0.0
    %507 = vmatpush1.msra.mxu0 0.0
    %508 = vmatprep.subr.mxu0 0.0
    %509 = vmatpush1.msra.mxu0 0.0
    %510 = vmatprep.subr.mxu0 0.0
    %511 = vmatpush1.msra.mxu0 0.0
    %512 = vmatprep.subr.mxu0 0.0
    %513 = vmatpush1.msra.mxu0 0.0
    %514 = vmatprep.subr.mxu0 0.0
    %515 = vmatpush1.msra.mxu0 0.0
    %516 = vmatprep.subr.mxu0 0.0
    %517 = vmatpush1.msra.mxu0 0.0
    %518 = vmatprep.subr.mxu0 0.0
    %519 = vmatpush1.msra.mxu0 0.0
    %520 = vmatprep.subr.mxu0 0.0
    %521 = vmatpush1.msra.mxu0 0.0
    %522 = vmatprep.subr.mxu0 0.0
    %523 = vmatpush1.msra.mxu0 0.0
    %524 = vmatprep.subr.mxu0 0.0
    %525 = vmatpush1.msra.mxu0 0.0
    %526 = vmatprep.subr.mxu0 0.0
    %527 = vmatpush1.msra.mxu0 0.0
    %528 = vmatprep.subr.mxu0 0.0
    %529 = vmatpush1.msra.mxu0 0.0
    %530 = vmatprep.subr.mxu0 0.0
    %531 = vmatpush1.msra.mxu0 0.0
    %532 = vmatprep.mubr.f32.mxu0 0.0
    %533 = vmatmul.mubr.f32.gmra.mrb[0].mxu0 %v463
    %v534 = vpop.f32.mrb[0].mxu0
    %v535 = vadd.f32 0.0, %v534
    %v536 = vpop.f32.mrb[0].mxu0
    %537 = vmatprep.mubr.f32.mxu0 0.0
    %538 = vmatmul.mubr.f32.gmra.mrb[0].mxu0 %v466
    %v539 = vpop.f32.mrb[0].mxu0
    %v540 = vadd.f32 0.0, %v539
    %v541 = vpop.f32.mrb[0].mxu0
    %542 = vdwg.mxu0
    %vm543 = vcmask 130048
    %v545 = vsel %vm543, %v451, 0
    %v548 = vsel %vm543, %v456, 0
    %550 = vmatprep.subr.mxu0 0.0
    %551 = vmatpush1.msra.mxu0 %v459
    %552 = vmatprep.subr.mxu0 0.0
    %553 = vmatpush1.msra.mxu0 %v460
    %554 = vmatprep.subr.mxu0 0.0
    %555 = vmatpush1.msra.mxu0 0.0
    %556 = vmatprep.subr.mxu0 0.0
    %557 = vmatpush1.msra.mxu0 0.0
    %558 = vmatprep.subr.mxu0 0.0
    %559 = vmatpush1.msra.mxu0 0.0
    %560 = vmatprep.subr.mxu0 0.0
    %561 = vmatpush1.msra.mxu0 0.0
    %562 = vmatprep.subr.mxu0 0.0
    %563 = vmatpush1.msra.mxu0 0.0
    %564 = vmatprep.subr.mxu0 0.0
    %565 = vmatpush1.msra.mxu0 0.0
    %566 = vmatprep.subr.mxu0 0.0
    %567 = vmatpush1.msra.mxu0 0.0
    %568 = vmatprep.subr.mxu0 0.0
    %569 = vmatpush1.msra.mxu0 0.0
    %570 = vmatprep.subr.mxu0 0.0
    %571 = vmatpush1.msra.mxu0 0.0
    %572 = vmatprep.subr.mxu0 0.0
    %573 = vmatpush1.msra.mxu0 0.0
    %574 = vmatprep.subr.mxu0 0.0
    %575 = vmatpush1.msra.mxu0 0.0
    %576 = vmatprep.subr.mxu0 0.0
    %577 = vmatpush1.msra.mxu0 0.0
    %578 = vmatprep.subr.mxu0 0.0
    %579 = vmatpush1.msra.mxu0 0.0
    %580 = vmatprep.subr.mxu0 0.0
    %581 = vmatpush1.msra.mxu0 0.0
    %582 = vmatprep.subr.mxu0 0.0
    %583 = vmatpush1.msra.mxu0 0.0
    %584 = vmatprep.subr.mxu0 0.0
    %585 = vmatpush1.msra.mxu0 0.0
    %586 = vmatprep.subr.mxu0 0.0
    %587 = vmatpush1.msra.mxu0 0.0
    %588 = vmatprep.subr.mxu0 0.0
    %589 = vmatpush1.msra.mxu0 0.0
    %590 = vmatprep.subr.mxu0 0.0
    %591 = vmatpush1.msra.mxu0 0.0
    %592 = vmatprep.subr.mxu0 0.0
    %593 = vmatpush1.msra.mxu0 0.0
    %594 = vmatprep.subr.mxu0 0.0
    %595 = vmatpush1.msra.mxu0 0.0
    %596 = vmatprep.subr.mxu0 0.0
    %597 = vmatpush1.msra.mxu0 0.0
    %598 = vmatprep.subr.mxu0 0.0
    %599 = vmatpush1.msra.mxu0 0.0
    %600 = vmatprep.subr.mxu0 0.0
    %601 = vmatpush1.msra.mxu0 0.0
    %602 = vmatprep.subr.mxu0 0.0
    %603 = vmatpush1.msra.mxu0 0.0
    %604 = vmatprep.subr.mxu0 0.0
    %605 = vmatpush1.msra.mxu0 0.0
    %606 = vmatprep.subr.mxu0 0.0
    %607 = vmatpush1.msra.mxu0 0.0
    %608 = vmatprep.subr.mxu0 0.0
    %609 = vmatpush1.msra.mxu0 0.0
    %610 = vmatprep.subr.mxu0 0.0
    %611 = vmatpush1.msra.mxu0 0.0
    %612 = vmatprep.subr.mxu0 0.0
    %613 = vmatpush1.msra.mxu0 0.0
    %614 = vmatprep.mubr.f32.mxu0 0.0
    %615 = vmatmul.mubr.f32.gmra.mrb[0].mxu0 %v545
    %v616 = vpop.f32.mrb[0].mxu0
    %v617 = vadd.f32 %v535, %v616
    %v618 = vpop.f32.mrb[0].mxu0
    %619 = vmatprep.mubr.f32.mxu0 0.0
    %620 = vmatmul.mubr.f32.gmra.mrb[0].mxu0 %v548
    %v621 = vpop.f32.mrb[0].mxu0
    %v622 = vadd.f32 %v540, %v621
    %v623 = vpop.f32.mrb[0].mxu0
    %624 = vdwg.mxu0
    %v625 = vld [vmem:[#allocation16] sm:$0x1]
    %v627 = vlaneseq
    %v628 = vshrl.u32 %v627, 7
    %v629 = vsub.s32 0, %v628
    %v630 = vrot.slane %v625, %v629
    %v632 = vadd.f32 %v617, %v630
    %v633 = vadd.f32 %v622, %v630
    %v635 = vsel %vm543, %v372, 0
    %637 = vmatprep.subr.mxu0 0.0
    %638 = vmatpush1.msra.mxu0 %v632
    %639 = vmatprep.subr.mxu0 0.0
    %640 = vmatpush1.msra.mxu0 %v633
    %641 = vmatprep.subr.mxu0 0.0
    %642 = vmatpush1.msra.mxu0 0.0
    %643 = vmatprep.subr.mxu0 0.0
    %644 = vmatpush1.msra.mxu0 0.0
    %645 = vmatprep.subr.mxu0 0.0
    %646 = vmatpush1.msra.mxu0 0.0
    %647 = vmatprep.subr.mxu0 0.0
    %648 = vmatpush1.msra.mxu0 0.0
    %649 = vmatprep.subr.mxu0 0.0
    %650 = vmatpush1.msra.mxu0 0.0
    %651 = vmatprep.subr.mxu0 0.0
    %652 = vmatpush1.msra.mxu0 0.0
    %653 = vmatprep.subr.mxu0 0.0
    %654 = vmatpush1.msra.mxu0 0.0
    %655 = vmatprep.subr.mxu0 0.0
    %656 = vmatpush1.msra.mxu0 0.0
    %657 = vmatprep.subr.mxu0 0.0
    %658 = vmatpush1.msra.mxu0 0.0
    %659 = vmatprep.subr.mxu0 0.0
    %660 = vmatpush1.msra.mxu0 0.0
    %661 = vmatprep.subr.mxu0 0.0
    %662 = vmatpush1.msra.mxu0 0.0
    %663 = vmatprep.subr.mxu0 0.0
    %664 = vmatpush1.msra.mxu0 0.0
    %665 = vmatprep.subr.mxu0 0.0
    %666 = vmatpush1.msra.mxu0 0.0
    %667 = vmatprep.subr.mxu0 0.0
    %668 = vmatpush1.msra.mxu0 0.0
    %669 = vmatprep.subr.mxu0 0.0
    %670 = vmatpush1.msra.mxu0 0.0
    %671 = vmatprep.subr.mxu0 0.0
    %672 = vmatpush1.msra.mxu0 0.0
    %673 = vmatprep.subr.mxu0 0.0
    %674 = vmatpush1.msra.mxu0 0.0
    %675 = vmatprep.subr.mxu0 0.0
    %676 = vmatpush1.msra.mxu0 0.0
    %677 = vmatprep.subr.mxu0 0.0
    %678 = vmatpush1.msra.mxu0 0.0
    %679 = vmatprep.subr.mxu0 0.0
    %680 = vmatpush1.msra.mxu0 0.0
    %681 = vmatprep.subr.mxu0 0.0
    %682 = vmatpush1.msra.mxu0 0.0
    %683 = vmatprep.subr.mxu0 0.0
    %684 = vmatpush1.msra.mxu0 0.0
    %685 = vmatprep.subr.mxu0 0.0
    %686 = vmatpush1.msra.mxu0 0.0
    %687 = vmatprep.subr.mxu0 0.0
    %688 = vmatpush1.msra.mxu0 0.0
    %689 = vmatprep.subr.mxu0 0.0
    %690 = vmatpush1.msra.mxu0 0.0
    %691 = vmatprep.subr.mxu0 0.0
    %692 = vmatpush1.msra.mxu0 0.0
    %693 = vmatprep.subr.mxu0 0.0
    %694 = vmatpush1.msra.mxu0 0.0
    %695 = vmatprep.subr.mxu0 0.0
    %696 = vmatpush1.msra.mxu0 0.0
    %697 = vmatprep.subr.mxu0 0.0
    %698 = vmatpush1.msra.mxu0 0.0
    %699 = vmatprep.subr.mxu0 0.0
    %700 = vmatpush1.msra.mxu0 0.0
    %701 = vmatprep.mubr.f32.mxu0 0.0
    %702 = vmatmul.mubr.f32.gmra.mrb[0].mxu0 %v635
    %v703 = vpop.f32.mrb[0].mxu0
    %v704 = vadd.f32 0.0, %v703
    %v705 = vpop.f32.mrb[0].mxu0
    %706 = vdwg.mxu0
    %708 = vset.pattern.permute.xlu0 0
    %709 = vperm.xlu0 %708, %v373
    %v710 = vpop.permute.xlu0 %709
    %v712 = vmul.f32 %v704, %v710
    %v713 = vld [vmem:[#allocation17] sm:$0xff]
    %v714 = vld [vmem:[#allocation17 + $0x8] sm:$0xff]
    %v715 = vld [vmem:[#allocation19] sm:$0xff]
    %v716 = vld [vmem:[#allocation19 + $0x8] sm:$0xff]
    %v717 = vld [vmem:[#allocation19 + $0x10] sm:$0xff]
    %v718 = vld [vmem:[#allocation19 + $0x18] sm:$0xff]
    %v719 = vld [vmem:[#allocation19 + $0x20] sm:$0xff]
    %v720 = vld [vmem:[#allocation19 + $0x28] sm:$0xff]
    %v721 = vld [vmem:[#allocation19 + $0x30] sm:$0xff]
    %v722 = vld [vmem:[#allocation19 + $0x38] sm:$0xff]
    %v723 = vld [vmem:[#allocation19 + $0x40] sm:$0xff]
    %v724 = vld [vmem:[#allocation19 + $0x48] sm:$0xff]
    %v725 = vld [vmem:[#allocation19 + $0x50] sm:$0xff]
    %v726 = vld [vmem:[#allocation19 + $0x58] sm:$0xff]
    %v727 = vld [vmem:[#allocation19 + $0x60] sm:$0xff]
    %v728 = vld [vmem:[#allocation19 + $0x68] sm:$0xff]
    %v729 = vld [vmem:[#allocation19 + $0x70] sm:$0xff]
    %v730 = vld [vmem:[#allocation19 + $0x78] sm:$0xff]
    %731 = vmatprep.subr.mxu0 0.0
    %732 = vmatpush1.msra.mxu0 %v715
    %733 = vmatprep.subr.mxu0 0.0
    %734 = vmatpush1.msra.mxu0 %v716
    %735 = vmatprep.subr.mxu0 0.0
    %736 = vmatpush1.msra.mxu0 %v717
    %737 = vmatprep.subr.mxu0 0.0
    %738 = vmatpush1.msra.mxu0 %v718
    %739 = vmatprep.subr.mxu0 0.0
    %740 = vmatpush1.msra.mxu0 %v719
    %741 = vmatprep.subr.mxu0 0.0
    %742 = vmatpush1.msra.mxu0 %v720
    %743 = vmatprep.subr.mxu0 0.0
    %744 = vmatpush1.msra.mxu0 %v721
    %745 = vmatprep.subr.mxu0 0.0
    %746 = vmatpush1.msra.mxu0 %v722
    %747 = vmatprep.subr.mxu0 0.0
    %748 = vmatpush1.msra.mxu0 %v723
    %749 = vmatprep.subr.mxu0 0.0
    %750 = vmatpush1.msra.mxu0 %v724
    %751 = vmatprep.subr.mxu0 0.0
    %752 = vmatpush1.msra.mxu0 %v725
    %753 = vmatprep.subr.mxu0 0.0
    %754 = vmatpush1.msra.mxu0 %v726
    %755 = vmatprep.subr.mxu0 0.0
    %756 = vmatpush1.msra.mxu0 %v727
    %757 = vmatprep.subr.mxu0 0.0
    %758 = vmatpush1.msra.mxu0 %v728
    %759 = vmatprep.subr.mxu0 0.0
    %760 = vmatpush1.msra.mxu0 %v729
    %761 = vmatprep.subr.mxu0 0.0
    %762 = vmatpush1.msra.mxu0 %v730
    %763 = vmatprep.subr.mxu0 0.0
    %764 = vmatpush1.msra.mxu0 0.0
    %765 = vmatprep.subr.mxu0 0.0
    %766 = vmatpush1.msra.mxu0 0.0
    %767 = vmatprep.subr.mxu0 0.0
    %768 = vmatpush1.msra.mxu0 0.0
    %769 = vmatprep.subr.mxu0 0.0
    %770 = vmatpush1.msra.mxu0 0.0
    %771 = vmatprep.subr.mxu0 0.0
    %772 = vmatpush1.msra.mxu0 0.0
    %773 = vmatprep.subr.mxu0 0.0
    %774 = vmatpush1.msra.mxu0 0.0
    %775 = vmatprep.subr.mxu0 0.0
    %776 = vmatpush1.msra.mxu0 0.0
    %777 = vmatprep.subr.mxu0 0.0
    %778 = vmatpush1.msra.mxu0 0.0
    %779 = vmatprep.subr.mxu0 0.0
    %780 = vmatpush1.msra.mxu0 0.0
    %781 = vmatprep.subr.mxu0 0.0
    %782 = vmatpush1.msra.mxu0 0.0
    %783 = vmatprep.subr.mxu0 0.0
    %784 = vmatpush1.msra.mxu0 0.0
    %785 = vmatprep.subr.mxu0 0.0
    %786 = vmatpush1.msra.mxu0 0.0
    %787 = vmatprep.subr.mxu0 0.0
    %788 = vmatpush1.msra.mxu0 0.0
    %789 = vmatprep.subr.mxu0 0.0
    %790 = vmatpush1.msra.mxu0 0.0
    %791 = vmatprep.subr.mxu0 0.0
    %792 = vmatpush1.msra.mxu0 0.0
    %793 = vmatprep.subr.mxu0 0.0
    %794 = vmatpush1.msra.mxu0 0.0
    %795 = vmatprep.mubr.f32.mxu0 0.0
    %796 = vmatmul.mubr.f32.gmra.mrb[0].mxu0 %v712
    %v797 = vpop.f32.mrb[0].mxu0
    %v798 = vadd.f32 0.0, %v797
    %v799 = vpop.f32.mrb[0].mxu0
    %800 = vdwg.mxu0
    %v802 = vsel %vm543, %v374, 0
    %804 = vmatprep.subr.mxu0 0.0
    %805 = vmatpush1.msra.mxu0 %v713
    %806 = vmatprep.subr.mxu0 0.0
    %807 = vmatpush1.msra.mxu0 %v714
    %808 = vmatprep.subr.mxu0 0.0
    %809 = vmatpush1.msra.mxu0 0.0
    %810 = vmatprep.subr.mxu0 0.0
    %811 = vmatpush1.msra.mxu0 0.0
    %812 = vmatprep.subr.mxu0 0.0
    %813 = vmatpush1.msra.mxu0 0.0
    %814 = vmatprep.subr.mxu0 0.0
    %815 = vmatpush1.msra.mxu0 0.0
    %816 = vmatprep.subr.mxu0 0.0
    %817 = vmatpush1.msra.mxu0 0.0
    %818 = vmatprep.subr.mxu0 0.0
    %819 = vmatpush1.msra.mxu0 0.0
    %820 = vmatprep.subr.mxu0 0.0
    %821 = vmatpush1.msra.mxu0 0.0
    %822 = vmatprep.subr.mxu0 0.0
    %823 = vmatpush1.msra.mxu0 0.0
    %824 = vmatprep.subr.mxu0 0.0
    %825 = vmatpush1.msra.mxu0 0.0
    %826 = vmatprep.subr.mxu0 0.0
    %827 = vmatpush1.msra.mxu0 0.0
    %828 = vmatprep.subr.mxu0 0.0
    %829 = vmatpush1.msra.mxu0 0.0
    %830 = vmatprep.subr.mxu0 0.0
    %831 = vmatpush1.msra.mxu0 0.0
    %832 = vmatprep.subr.mxu0 0.0
    %833 = vmatpush1.msra.mxu0 0.0
    %834 = vmatprep.subr.mxu0 0.0
    %835 = vmatpush1.msra.mxu0 0.0
    %836 = vmatprep.subr.mxu0 0.0
    %837 = vmatpush1.msra.mxu0 0.0
    %838 = vmatprep.subr.mxu0 0.0
    %839 = vmatpush1.msra.mxu0 0.0
    %840 = vmatprep.subr.mxu0 0.0
    %841 = vmatpush1.msra.mxu0 0.0
    %842 = vmatprep.subr.mxu0 0.0
    %843 = vmatpush1.msra.mxu0 0.0
    %844 = vmatprep.subr.mxu0 0.0
    %845 = vmatpush1.msra.mxu0 0.0
    %846 = vmatprep.subr.mxu0 0.0
    %847 = vmatpush1.msra.mxu0 0.0
    %848 = vmatprep.subr.mxu0 0.0
    %849 = vmatpush1.msra.mxu0 0.0
    %850 = vmatprep.subr.mxu0 0.0
    %851 = vmatpush1.msra.mxu0 0.0
    %852 = vmatprep.subr.mxu0 0.0
    %853 = vmatpush1.msra.mxu0 0.0
    %854 = vmatprep.subr.mxu0 0.0
    %855 = vmatpush1.msra.mxu0 0.0
    %856 = vmatprep.subr.mxu0 0.0
    %857 = vmatpush1.msra.mxu0 0.0
    %858 = vmatprep.subr.mxu0 0.0
    %859 = vmatpush1.msra.mxu0 0.0
    %860 = vmatprep.subr.mxu0 0.0
    %861 = vmatpush1.msra.mxu0 0.0
    %862 = vmatprep.subr.mxu0 0.0
    %863 = vmatpush1.msra.mxu0 0.0
    %864 = vmatprep.subr.mxu0 0.0
    %865 = vmatpush1.msra.mxu0 0.0
    %866 = vmatprep.subr.mxu0 0.0
    %867 = vmatpush1.msra.mxu0 0.0
    %868 = vmatprep.mubr.f32.mxu0 0.0
    %869 = vmatmul.mubr.f32.gmra.mrb[0].mxu0 %v802
    %v870 = vpop.f32.mrb[0].mxu0
    %v871 = vadd.f32 %v798, %v870
    %v872 = vpop.f32.mrb[0].mxu0
    %873 = vdwg.mxu0
    %v874 = vld [vmem:[#allocation20] sm:$0x1]
    %v876 = vlaneseq
    %v877 = vshrl.u32 %v876, 7
    %v878 = vsub.s32 0, %v877
    %v879 = vrot.slane %v874, %v878
    %v881 = vadd.f32 %v871, %v879
    %v882 = vmax.f32 %v881, 0.0
    %883 = vmatprep.subr.mxu0 0.0
    %884 = vmatpush1.msra.mxu0 %v882
    %885 = vmatprep.subr.mxu0 0.0
    %886 = vmatpush1.msra.mxu0 0.0
    %887 = vmatprep.subr.mxu0 0.0
    %888 = vmatpush1.msra.mxu0 0.0
    %889 = vmatprep.subr.mxu0 0.0
    %890 = vmatpush1.msra.mxu0 0.0
    %891 = vmatprep.subr.mxu0 0.0
    %892 = vmatpush1.msra.mxu0 0.0
    %893 = vmatprep.subr.mxu0 0.0
    %894 = vmatpush1.msra.mxu0 0.0
    %895 = vmatprep.subr.mxu0 0.0
    %896 = vmatpush1.msra.mxu0 0.0
    %897 = vmatprep.subr.mxu0 0.0
    %898 = vmatpush1.msra.mxu0 0.0
    %899 = vmatprep.subr.mxu0 0.0
    %900 = vmatpush1.msra.mxu0 0.0
    %901 = vmatprep.subr.mxu0 0.0
    %902 = vmatpush1.msra.mxu0 0.0
    %903 = vmatprep.subr.mxu0 0.0
    %904 = vmatpush1.msra.mxu0 0.0
    %905 = vmatprep.subr.mxu0 0.0
    %906 = vmatpush1.msra.mxu0 0.0
    %907 = vmatprep.subr.mxu0 0.0
    %908 = vmatpush1.msra.mxu0 0.0
    %909 = vmatprep.subr.mxu0 0.0
    %910 = vmatpush1.msra.mxu0 0.0
    %911 = vmatprep.subr.mxu0 0.0
    %912 = vmatpush1.msra.mxu0 0.0
    %913 = vmatprep.subr.mxu0 0.0
    %914 = vmatpush1.msra.mxu0 0.0
    %915 = vmatprep.subr.mxu0 0.0
    %916 = vmatpush1.msra.mxu0 0.0
    %917 = vmatprep.subr.mxu0 0.0
    %918 = vmatpush1.msra.mxu0 0.0
    %919 = vmatprep.subr.mxu0 0.0
    %920 = vmatpush1.msra.mxu0 0.0
    %921 = vmatprep.subr.mxu0 0.0
    %922 = vmatpush1.msra.mxu0 0.0
    %923 = vmatprep.subr.mxu0 0.0
    %924 = vmatpush1.msra.mxu0 0.0
    %925 = vmatprep.subr.mxu0 0.0
    %926 = vmatpush1.msra.mxu0 0.0
    %927 = vmatprep.subr.mxu0 0.0
    %928 = vmatpush1.msra.mxu0 0.0
    %929 = vmatprep.subr.mxu0 0.0
    %930 = vmatpush1.msra.mxu0 0.0
    %931 = vmatprep.subr.mxu0 0.0
    %932 = vmatpush1.msra.mxu0 0.0
    %933 = vmatprep.subr.mxu0 0.0
    %934 = vmatpush1.msra.mxu0 0.0
    %935 = vmatprep.subr.mxu0 0.0
    %936 = vmatpush1.msra.mxu0 0.0
    %937 = vmatprep.subr.mxu0 0.0
    %938 = vmatpush1.msra.mxu0 0.0
    %939 = vmatprep.subr.mxu0 0.0
    %940 = vmatpush1.msra.mxu0 0.0
    %941 = vmatprep.subr.mxu0 0.0
    %942 = vmatpush1.msra.mxu0 0.0
    %943 = vmatprep.subr.mxu0 0.0
    %944 = vmatpush1.msra.mxu0 0.0
    %945 = vmatprep.subr.mxu0 0.0
    %946 = vmatpush1.msra.mxu0 0.0
    %947 = vmatprep.mubr.f32.mxu0 0.0
    %948 = vmatmul.mubr.f32.gmra.mrb[0].mxu0 %v379
    %v949 = vpop.f32.mrb[0].mxu0
    %v950 = vadd.f32 0.0, %v949
    %v951 = vpop.f32.mrb[0].mxu0
    %952 = vmatprep.mubr.f32.mxu0 0.0
    %953 = vmatmul.mubr.f32.gmra.mrb[0].mxu0 %v382
    %v954 = vpop.f32.mrb[0].mxu0
    %v955 = vadd.f32 0.0, %v954
    %v956 = vpop.f32.mrb[0].mxu0
    %957 = vdwg.mxu0
    %v958 = vld [vmem:[#allocation22] sm:$0xff]
    %v959 = vld [vmem:[#allocation22 + $0x8] sm:$0xff]
    %v960 = vld [vmem:[#allocation22 + $0x10] sm:$0xff]
    %v961 = vld [vmem:[#allocation22 + $0x18] sm:$0xff]
    %v962 = vld [vmem:[#allocation22 + $0x20] sm:$0xff]
    %v963 = vld [vmem:[#allocation22 + $0x28] sm:$0xff]
    %v964 = vld [vmem:[#allocation22 + $0x30] sm:$0xff]
    %v965 = vld [vmem:[#allocation22 + $0x38] sm:$0xff]
    %v966 = vld [vmem:[#allocation22 + $0x40] sm:$0xff]
    %v967 = vld [vmem:[#allocation22 + $0x48] sm:$0xff]
    %v968 = vld [vmem:[#allocation22 + $0x50] sm:$0xff]
    %v969 = vld [vmem:[#allocation22 + $0x58] sm:$0xff]
    %v970 = vld [vmem:[#allocation22 + $0x60] sm:$0xff]
    %v971 = vld [vmem:[#allocation22 + $0x68] sm:$0xff]
    %v972 = vld [vmem:[#allocation22 + $0x70] sm:$0xff]
    %v973 = vld [vmem:[#allocation22 + $0x78] sm:$0xff]
    %v974 = vld [vmem:[#allocation23] sm:$0xff]
    %975 = vmatprep.subr.mxu0 0.0
    %976 = vmatpush1.msra.mxu0 %v974
    %977 = vmatprep.subr.mxu0 0.0
    %978 = vmatpush1.msra.mxu0 0.0
    %979 = vmatprep.subr.mxu0 0.0
    %980 = vmatpush1.msra.mxu0 0.0
    %981 = vmatprep.subr.mxu0 0.0
    %982 = vmatpush1.msra.mxu0 0.0
    %983 = vmatprep.subr.mxu0 0.0
    %984 = vmatpush1.msra.mxu0 0.0
    %985 = vmatprep.subr.mxu0 0.0
    %986 = vmatpush1.msra.mxu0 0.0
    %987 = vmatprep.subr.mxu0 0.0
    %988 = vmatpush1.msra.mxu0 0.0
    %989 = vmatprep.subr.mxu0 0.0
    %990 = vmatpush1.msra.mxu0 0.0
    %991 = vmatprep.subr.mxu0 0.0
    %992 = vmatpush1.msra.mxu0 0.0
    %993 = vmatprep.subr.mxu0 0.0
    %994 = vmatpush1.msra.mxu0 0.0
    %995 = vmatprep.subr.mxu0 0.0
    %996 = vmatpush1.msra.mxu0 0.0
    %997 = vmatprep.subr.mxu0 0.0
    %998 = vmatpush1.msra.mxu0 0.0
    %999 = vmatprep.subr.mxu0 0.0
    %1000 = vmatpush1.msra.mxu0 0.0
    %1001 = vmatprep.subr.mxu0 0.0
    %1002 = vmatpush1.msra.mxu0 0.0
    %1003 = vmatprep.subr.mxu0 0.0
    %1004 = vmatpush1.msra.mxu0 0.0
    %1005 = vmatprep.subr.mxu0 0.0
    %1006 = vmatpush1.msra.mxu0 0.0
    %1007 = vmatprep.subr.mxu0 0.0
    %1008 = vmatpush1.msra.mxu0 0.0
    %1009 = vmatprep.subr.mxu0 0.0
    %1010 = vmatpush1.msra.mxu0 0.0
    %1011 = vmatprep.subr.mxu0 0.0
    %1012 = vmatpush1.msra.mxu0 0.0
    %1013 = vmatprep.subr.mxu0 0.0
    %1014 = vmatpush1.msra.mxu0 0.0
    %1015 = vmatprep.subr.mxu0 0.0
    %1016 = vmatpush1.msra.mxu0 0.0
    %1017 = vmatprep.subr.mxu0 0.0
    %1018 = vmatpush1.msra.mxu0 0.0
    %1019 = vmatprep.subr.mxu0 0.0
    %1020 = vmatpush1.msra.mxu0 0.0
    %1021 = vmatprep.subr.mxu0 0.0
    %1022 = vmatpush1.msra.mxu0 0.0
    %1023 = vmatprep.subr.mxu0 0.0
    %1024 = vmatpush1.msra.mxu0 0.0
    %1025 = vmatprep.subr.mxu0 0.0
    %1026 = vmatpush1.msra.mxu0 0.0
    %1027 = vmatprep.subr.mxu0 0.0
    %1028 = vmatpush1.msra.mxu0 0.0
    %1029 = vmatprep.subr.mxu0 0.0
    %1030 = vmatpush1.msra.mxu0 0.0
    %1031 = vmatprep.subr.mxu0 0.0
    %1032 = vmatpush1.msra.mxu0 0.0
    %1033 = vmatprep.subr.mxu0 0.0
    %1034 = vmatpush1.msra.mxu0 0.0
    %1035 = vmatprep.subr.mxu0 0.0
    %1036 = vmatpush1.msra.mxu0 0.0
    %1037 = vmatprep.subr.mxu0 0.0
    %1038 = vmatpush1.msra.mxu0 0.0
    %1039 = vmatprep.mubr.f32.mxu0 0.0
    %1040 = vmatmul.mubr.f32.gmra.mrb[0].mxu0 %v463
    %v1041 = vpop.f32.mrb[0].mxu0
    %v1042 = vadd.f32 0.0, %v1041
    %v1043 = vpop.f32.mrb[0].mxu0
    %1044 = vmatprep.mubr.f32.mxu0 0.0
    %1045 = vmatmul.mubr.f32.gmra.mrb[0].mxu0 %v466
    %v1046 = vpop.f32.mrb[0].mxu0
    %v1047 = vadd.f32 0.0, %v1046
    %v1048 = vpop.f32.mrb[0].mxu0
    %1049 = vdwg.mxu0
    %1050 = vmatprep.subr.mxu0 0.0
    %1051 = vmatpush1.msra.mxu0 %v958
    %1052 = vmatprep.subr.mxu0 0.0
    %1053 = vmatpush1.msra.mxu0 %v959
    %1054 = vmatprep.subr.mxu0 0.0
    %1055 = vmatpush1.msra.mxu0 %v960
    %1056 = vmatprep.subr.mxu0 0.0
    %1057 = vmatpush1.msra.mxu0 %v961
    %1058 = vmatprep.subr.mxu0 0.0
    %1059 = vmatpush1.msra.mxu0 %v962
    %1060 = vmatprep.subr.mxu0 0.0
    %1061 = vmatpush1.msra.mxu0 %v963
    %1062 = vmatprep.subr.mxu0 0.0
    %1063 = vmatpush1.msra.mxu0 %v964
    %1064 = vmatprep.subr.mxu0 0.0
    %1065 = vmatpush1.msra.mxu0 %v965
    %1066 = vmatprep.subr.mxu0 0.0
    %1067 = vmatpush1.msra.mxu0 %v966
    %1068 = vmatprep.subr.mxu0 0.0
    %1069 = vmatpush1.msra.mxu0 %v967
    %1070 = vmatprep.subr.mxu0 0.0
    %1071 = vmatpush1.msra.mxu0 %v968
    %1072 = vmatprep.subr.mxu0 0.0
    %1073 = vmatpush1.msra.mxu0 %v969
    %1074 = vmatprep.subr.mxu0 0.0
    %1075 = vmatpush1.msra.mxu0 %v970
    %1076 = vmatprep.subr.mxu0 0.0
    %1077 = vmatpush1.msra.mxu0 %v971
    %1078 = vmatprep.subr.mxu0 0.0
    %1079 = vmatpush1.msra.mxu0 %v972
    %1080 = vmatprep.subr.mxu0 0.0
    %1081 = vmatpush1.msra.mxu0 %v973
    %1082 = vmatprep.subr.mxu0 0.0
    %1083 = vmatpush1.msra.mxu0 0.0
    %1084 = vmatprep.subr.mxu0 0.0
    %1085 = vmatpush1.msra.mxu0 0.0
    %1086 = vmatprep.subr.mxu0 0.0
    %1087 = vmatpush1.msra.mxu0 0.0
    %1088 = vmatprep.subr.mxu0 0.0
    %1089 = vmatpush1.msra.mxu0 0.0
    %1090 = vmatprep.subr.mxu0 0.0
    %1091 = vmatpush1.msra.mxu0 0.0
    %1092 = vmatprep.subr.mxu0 0.0
    %1093 = vmatpush1.msra.mxu0 0.0
    %1094 = vmatprep.subr.mxu0 0.0
    %1095 = vmatpush1.msra.mxu0 0.0
    %1096 = vmatprep.subr.mxu0 0.0
    %1097 = vmatpush1.msra.mxu0 0.0
    %1098 = vmatprep.subr.mxu0 0.0
    %1099 = vmatpush1.msra.mxu0 0.0
    %1100 = vmatprep.subr.mxu0 0.0
    %1101 = vmatpush1.msra.mxu0 0.0
    %1102 = vmatprep.subr.mxu0 0.0
    %1103 = vmatpush1.msra.mxu0 0.0
    %1104 = vmatprep.subr.mxu0 0.0
    %1105 = vmatpush1.msra.mxu0 0.0
    %1106 = vmatprep.subr.mxu0 0.0
    %1107 = vmatpush1.msra.mxu0 0.0
    %1108 = vmatprep.subr.mxu0 0.0
    %1109 = vmatpush1.msra.mxu0 0.0
    %1110 = vmatprep.subr.mxu0 0.0
    %1111 = vmatpush1.msra.mxu0 0.0
    %1112 = vmatprep.subr.mxu0 0.0
    %1113 = vmatpush1.msra.mxu0 0.0
    %1114 = vmatprep.mubr.f32.mxu0 0.0
    %1115 = vmatmul.mubr.f32.gmra.mrb[0].mxu0 %v950
    %v1116 = vpop.f32.mrb[0].mxu0
    %v1117 = vadd.f32 %v1042, %v1116
    %v1118 = vpop.f32.mrb[0].mxu0
    %1119 = vmatprep.mubr.f32.mxu0 0.0
    %1120 = vmatmul.mubr.f32.gmra.mrb[0].mxu0 %v955
    %v1121 = vpop.f32.mrb[0].mxu0
    %v1122 = vadd.f32 %v1047, %v1121
    %v1123 = vpop.f32.mrb[0].mxu0
    %1124 = vdwg.mxu0
    %v1125 = vld [vmem:[#allocation25] sm:$0x1]
    %v1127 = vlaneseq
    %v1128 = vshrl.u32 %v1127, 7
    %v1129 = vsub.s32 0, %v1128
    %v1130 = vrot.slane %v1125, %v1129
    %v1132 = vadd.f32 %v1117, %v1130
    %v1133 = vadd.f32 %v1122, %v1130
    %1134 = vmatprep.subr.mxu0 0.0
    %1135 = vmatpush1.msra.mxu0 %v1132
    %1136 = vmatprep.subr.mxu0 0.0
    %1137 = vmatpush1.msra.mxu0 %v1133
    %1138 = vmatprep.subr.mxu0 0.0
    %1139 = vmatpush1.msra.mxu0 0.0
    %1140 = vmatprep.subr.mxu0 0.0
    %1141 = vmatpush1.msra.mxu0 0.0
    %1142 = vmatprep.subr.mxu0 0.0
    %1143 = vmatpush1.msra.mxu0 0.0
    %1144 = vmatprep.subr.mxu0 0.0
    %1145 = vmatpush1.msra.mxu0 0.0
    %1146 = vmatprep.subr.mxu0 0.0
    %1147 = vmatpush1.msra.mxu0 0.0
    %1148 = vmatprep.subr.mxu0 0.0
    %1149 = vmatpush1.msra.mxu0 0.0
    %1150 = vmatprep.subr.mxu0 0.0
    %1151 = vmatpush1.msra.mxu0 0.0
    %1152 = vmatprep.subr.mxu0 0.0
    %1153 = vmatpush1.msra.mxu0 0.0
    %1154 = vmatprep.subr.mxu0 0.0
    %1155 = vmatpush1.msra.mxu0 0.0
    %1156 = vmatprep.subr.mxu0 0.0
    %1157 = vmatpush1.msra.mxu0 0.0
    %1158 = vmatprep.subr.mxu0 0.0
    %1159 = vmatpush1.msra.mxu0 0.0
    %1160 = vmatprep.subr.mxu0 0.0
    %1161 = vmatpush1.msra.mxu0 0.0
    %1162 = vmatprep.subr.mxu0 0.0
    %1163 = vmatpush1.msra.mxu0 0.0
    %1164 = vmatprep.subr.mxu0 0.0
    %1165 = vmatpush1.msra.mxu0 0.0
    %1166 = vmatprep.subr.mxu0 0.0
    %1167 = vmatpush1.msra.mxu0 0.0
    %1168 = vmatprep.subr.mxu0 0.0
    %1169 = vmatpush1.msra.mxu0 0.0
    %1170 = vmatprep.subr.mxu0 0.0
    %1171 = vmatpush1.msra.mxu0 0.0
    %1172 = vmatprep.subr.mxu0 0.0
    %1173 = vmatpush1.msra.mxu0 0.0
    %1174 = vmatprep.subr.mxu0 0.0
    %1175 = vmatpush1.msra.mxu0 0.0
    %1176 = vmatprep.subr.mxu0 0.0
    %1177 = vmatpush1.msra.mxu0 0.0
    %1178 = vmatprep.subr.mxu0 0.0
    %1179 = vmatpush1.msra.mxu0 0.0
    %1180 = vmatprep.subr.mxu0 0.0
    %1181 = vmatpush1.msra.mxu0 0.0
    %1182 = vmatprep.subr.mxu0 0.0
    %1183 = vmatpush1.msra.mxu0 0.0
    %1184 = vmatprep.subr.mxu0 0.0
    %1185 = vmatpush1.msra.mxu0 0.0
    %1186 = vmatprep.subr.mxu0 0.0
    %1187 = vmatpush1.msra.mxu0 0.0
    %1188 = vmatprep.subr.mxu0 0.0
    %1189 = vmatpush1.msra.mxu0 0.0
    %1190 = vmatprep.subr.mxu0 0.0
    %1191 = vmatpush1.msra.mxu0 0.0
    %1192 = vmatprep.subr.mxu0 0.0
    %1193 = vmatpush1.msra.mxu0 0.0
    %1194 = vmatprep.subr.mxu0 0.0
    %1195 = vmatpush1.msra.mxu0 0.0
    %1196 = vmatprep.subr.mxu0 0.0
    %1197 = vmatpush1.msra.mxu0 0.0
    %1198 = vmatprep.mubr.f32.mxu0 0.0
    %1199 = vmatmul.mubr.f32.gmra.mrb[0].mxu0 %v635
    %v1200 = vpop.f32.mrb[0].mxu0
    %v1201 = vadd.f32 0.0, %v1200
    %v1202 = vpop.f32.mrb[0].mxu0
    %1203 = vdwg.mxu0
    %v1204 = vmul.f32 %v1201, %v710
    %v1205 = vld [vmem:[#allocation26] sm:$0xff]
    %v1206 = vld [vmem:[#allocation26 + $0x8] sm:$0xff]
    %v1207 = vld [vmem:[#allocation26 + $0x10] sm:$0xff]
    %v1208 = vld [vmem:[#allocation26 + $0x18] sm:$0xff]
    %v1209 = vld [vmem:[#allocation26 + $0x20] sm:$0xff]
    %v1210 = vld [vmem:[#allocation26 + $0x28] sm:$0xff]
    %v1211 = vld [vmem:[#allocation26 + $0x30] sm:$0xff]
    %v1212 = vld [vmem:[#allocation26 + $0x38] sm:$0xff]
    %v1213 = vld [vmem:[#allocation26 + $0x40] sm:$0xff]
    %v1214 = vld [vmem:[#allocation26 + $0x48] sm:$0xff]
    %v1215 = vld [vmem:[#allocation26 + $0x50] sm:$0xff]
    %v1216 = vld [vmem:[#allocation26 + $0x58] sm:$0xff]
    %v1217 = vld [vmem:[#allocation26 + $0x60] sm:$0xff]
    %v1218 = vld [vmem:[#allocation26 + $0x68] sm:$0xff]
    %v1219 = vld [vmem:[#allocation26 + $0x70] sm:$0xff]
    %v1220 = vld [vmem:[#allocation26 + $0x78] sm:$0xff]
    %v1221 = vld [vmem:[#allocation28] sm:$0xff]
    %v1222 = vld [vmem:[#allocation28 + $0x8] sm:$0xff]
    %v1223 = vld [vmem:[#allocation28 + $0x10] sm:$0xff]
    %v1224 = vld [vmem:[#allocation28 + $0x18] sm:$0xff]
    %vm1225 = vcmask 261120
    %v1227 = vsel %vm1225, %v1204, 0
    %1229 = vmatprep.subr.mxu0 0.0
    %1230 = vmatpush1.msra.mxu0 %v1221
    %1231 = vmatprep.subr.mxu0 0.0
    %1232 = vmatpush1.msra.mxu0 %v1222
    %1233 = vmatprep.subr.mxu0 0.0
    %1234 = vmatpush1.msra.mxu0 %v1223
    %1235 = vmatprep.subr.mxu0 0.0
    %1236 = vmatpush1.msra.mxu0 %v1224
    %1237 = vmatprep.subr.mxu0 0.0
    %1238 = vmatpush1.msra.mxu0 0.0
    %1239 = vmatprep.subr.mxu0 0.0
    %1240 = vmatpush1.msra.mxu0 0.0
    %1241 = vmatprep.subr.mxu0 0.0
    %1242 = vmatpush1.msra.mxu0 0.0
    %1243 = vmatprep.subr.mxu0 0.0
    %1244 = vmatpush1.msra.mxu0 0.0
    %1245 = vmatprep.subr.mxu0 0.0
    %1246 = vmatpush1.msra.mxu0 0.0
    %1247 = vmatprep.subr.mxu0 0.0
    %1248 = vmatpush1.msra.mxu0 0.0
    %1249 = vmatprep.subr.mxu0 0.0
    %1250 = vmatpush1.msra.mxu0 0.0
    %1251 = vmatprep.subr.mxu0 0.0
    %1252 = vmatpush1.msra.mxu0 0.0
    %1253 = vmatprep.subr.mxu0 0.0
    %1254 = vmatpush1.msra.mxu0 0.0
    %1255 = vmatprep.subr.mxu0 0.0
    %1256 = vmatpush1.msra.mxu0 0.0
    %1257 = vmatprep.subr.mxu0 0.0
    %1258 = vmatpush1.msra.mxu0 0.0
    %1259 = vmatprep.subr.mxu0 0.0
    %1260 = vmatpush1.msra.mxu0 0.0
    %1261 = vmatprep.subr.mxu0 0.0
    %1262 = vmatpush1.msra.mxu0 0.0
    %1263 = vmatprep.subr.mxu0 0.0
    %1264 = vmatpush1.msra.mxu0 0.0
    %1265 = vmatprep.subr.mxu0 0.0
    %1266 = vmatpush1.msra.mxu0 0.0
    %1267 = vmatprep.subr.mxu0 0.0
    %1268 = vmatpush1.msra.mxu0 0.0
    %1269 = vmatprep.subr.mxu0 0.0
    %1270 = vmatpush1.msra.mxu0 0.0
    %1271 = vmatprep.subr.mxu0 0.0
    %1272 = vmatpush1.msra.mxu0 0.0
    %1273 = vmatprep.subr.mxu0 0.0
    %1274 = vmatpush1.msra.mxu0 0.0
    %1275 = vmatprep.subr.mxu0 0.0
    %1276 = vmatpush1.msra.mxu0 0.0
    %1277 = vmatprep.subr.mxu0 0.0
    %1278 = vmatpush1.msra.mxu0 0.0
    %1279 = vmatprep.subr.mxu0 0.0
    %1280 = vmatpush1.msra.mxu0 0.0
    %1281 = vmatprep.subr.mxu0 0.0
    %1282 = vmatpush1.msra.mxu0 0.0
    %1283 = vmatprep.subr.mxu0 0.0
    %1284 = vmatpush1.msra.mxu0 0.0
    %1285 = vmatprep.subr.mxu0 0.0
    %1286 = vmatpush1.msra.mxu0 0.0
    %1287 = vmatprep.subr.mxu0 0.0
    %1288 = vmatpush1.msra.mxu0 0.0
    %1289 = vmatprep.subr.mxu0 0.0
    %1290 = vmatpush1.msra.mxu0 0.0
    %1291 = vmatprep.subr.mxu0 0.0
    %1292 = vmatpush1.msra.mxu0 0.0
    %1293 = vmatprep.mubr.f32.mxu0 0.0
    %1294 = vmatmul.mubr.f32.gmra.mrb[0].mxu0 %v1227
    %v1295 = vpop.f32.mrb[0].mxu0
    %v1296 = vadd.f32 0.0, %v1295
    %v1297 = vpop.f32.mrb[0].mxu0
    %1298 = vdwg.mxu0
    %1299 = vmatprep.subr.mxu0 0.0
    %1300 = vmatpush1.msra.mxu0 %v1205
    %1301 = vmatprep.subr.mxu0 0.0
    %1302 = vmatpush1.msra.mxu0 %v1206
    %1303 = vmatprep.subr.mxu0 0.0
    %1304 = vmatpush1.msra.mxu0 %v1207
    %1305 = vmatprep.subr.mxu0 0.0
    %1306 = vmatpush1.msra.mxu0 %v1208
    %1307 = vmatprep.subr.mxu0 0.0
    %1308 = vmatpush1.msra.mxu0 %v1209
    %1309 = vmatprep.subr.mxu0 0.0
    %1310 = vmatpush1.msra.mxu0 %v1210
    %1311 = vmatprep.subr.mxu0 0.0
    %1312 = vmatpush1.msra.mxu0 %v1211
    %1313 = vmatprep.subr.mxu0 0.0
    %1314 = vmatpush1.msra.mxu0 %v1212
    %1315 = vmatprep.subr.mxu0 0.0
    %1316 = vmatpush1.msra.mxu0 %v1213
    %1317 = vmatprep.subr.mxu0 0.0
    %1318 = vmatpush1.msra.mxu0 %v1214
    %1319 = vmatprep.subr.mxu0 0.0
    %1320 = vmatpush1.msra.mxu0 %v1215
    %1321 = vmatprep.subr.mxu0 0.0
    %1322 = vmatpush1.msra.mxu0 %v1216
    %1323 = vmatprep.subr.mxu0 0.0
    %1324 = vmatpush1.msra.mxu0 %v1217
    %1325 = vmatprep.subr.mxu0 0.0
    %1326 = vmatpush1.msra.mxu0 %v1218
    %1327 = vmatprep.subr.mxu0 0.0
    %1328 = vmatpush1.msra.mxu0 %v1219
    %1329 = vmatprep.subr.mxu0 0.0
    %1330 = vmatpush1.msra.mxu0 %v1220
    %1331 = vmatprep.subr.mxu0 0.0
    %1332 = vmatpush1.msra.mxu0 0.0
    %1333 = vmatprep.subr.mxu0 0.0
    %1334 = vmatpush1.msra.mxu0 0.0
    %1335 = vmatprep.subr.mxu0 0.0
    %1336 = vmatpush1.msra.mxu0 0.0
    %1337 = vmatprep.subr.mxu0 0.0
    %1338 = vmatpush1.msra.mxu0 0.0
    %1339 = vmatprep.subr.mxu0 0.0
    %1340 = vmatpush1.msra.mxu0 0.0
    %1341 = vmatprep.subr.mxu0 0.0
    %1342 = vmatpush1.msra.mxu0 0.0
    %1343 = vmatprep.subr.mxu0 0.0
    %1344 = vmatpush1.msra.mxu0 0.0
    %1345 = vmatprep.subr.mxu0 0.0
    %1346 = vmatpush1.msra.mxu0 0.0
    %1347 = vmatprep.subr.mxu0 0.0
    %1348 = vmatpush1.msra.mxu0 0.0
    %1349 = vmatprep.subr.mxu0 0.0
    %1350 = vmatpush1.msra.mxu0 0.0
    %1351 = vmatprep.subr.mxu0 0.0
    %1352 = vmatpush1.msra.mxu0 0.0
    %1353 = vmatprep.subr.mxu0 0.0
    %1354 = vmatpush1.msra.mxu0 0.0
    %1355 = vmatprep.subr.mxu0 0.0
    %1356 = vmatpush1.msra.mxu0 0.0
    %1357 = vmatprep.subr.mxu0 0.0
    %1358 = vmatpush1.msra.mxu0 0.0
    %1359 = vmatprep.subr.mxu0 0.0
    %1360 = vmatpush1.msra.mxu0 0.0
    %1361 = vmatprep.subr.mxu0 0.0
    %1362 = vmatpush1.msra.mxu0 0.0
    %1363 = vmatprep.mubr.f32.mxu0 0.0
    %1364 = vmatmul.mubr.f32.gmra.mrb[0].mxu0 %v882
    %v1365 = vpop.f32.mrb[0].mxu0
    %v1366 = vadd.f32 %v1296, %v1365
    %v1367 = vpop.f32.mrb[0].mxu0
    %1368 = vdwg.mxu0
    %v1369 = vld [vmem:[#allocation29] sm:$0x1]
    %v1371 = vlaneseq
    %v1372 = vshrl.u32 %v1371, 7
    %v1373 = vsub.s32 0, %v1372
    %v1374 = vrot.slane %v1369, %v1373
    %v1376 = vadd.f32 %v1366, %v1374
    %v1377 = vmax.f32 %v1376, 0.0
    %1378 = vmatprep.subr.mxu0 0.0
    %1379 = vmatpush1.msra.mxu0 %v1377
    %1380 = vmatprep.subr.mxu0 0.0
    %1381 = vmatpush1.msra.mxu0 0.0
    %1382 = vmatprep.subr.mxu0 0.0
    %1383 = vmatpush1.msra.mxu0 0.0
    %1384 = vmatprep.subr.mxu0 0.0
    %1385 = vmatpush1.msra.mxu0 0.0
    %1386 = vmatprep.subr.mxu0 0.0
    %1387 = vmatpush1.msra.mxu0 0.0
    %1388 = vmatprep.subr.mxu0 0.0
    %1389 = vmatpush1.msra.mxu0 0.0
    %1390 = vmatprep.subr.mxu0 0.0
    %1391 = vmatpush1.msra.mxu0 0.0
    %1392 = vmatprep.subr.mxu0 0.0
    %1393 = vmatpush1.msra.mxu0 0.0
    %1394 = vmatprep.subr.mxu0 0.0
    %1395 = vmatpush1.msra.mxu0 0.0
    %1396 = vmatprep.subr.mxu0 0.0
    %1397 = vmatpush1.msra.mxu0 0.0
    %1398 = vmatprep.subr.mxu0 0.0
    %1399 = vmatpush1.msra.mxu0 0.0
    %1400 = vmatprep.subr.mxu0 0.0
    %1401 = vmatpush1.msra.mxu0 0.0
    %1402 = vmatprep.subr.mxu0 0.0
    %1403 = vmatpush1.msra.mxu0 0.0
    %1404 = vmatprep.subr.mxu0 0.0
    %1405 = vmatpush1.msra.mxu0 0.0
    %1406 = vmatprep.subr.mxu0 0.0
    %1407 = vmatpush1.msra.mxu0 0.0
    %1408 = vmatprep.subr.mxu0 0.0
    %1409 = vmatpush1.msra.mxu0 0.0
    %1410 = vmatprep.subr.mxu0 0.0
    %1411 = vmatpush1.msra.mxu0 0.0
    %1412 = vmatprep.subr.mxu0 0.0
    %1413 = vmatpush1.msra.mxu0 0.0
    %1414 = vmatprep.subr.mxu0 0.0
    %1415 = vmatpush1.msra.mxu0 0.0
    %1416 = vmatprep.subr.mxu0 0.0
    %1417 = vmatpush1.msra.mxu0 0.0
    %1418 = vmatprep.subr.mxu0 0.0
    %1419 = vmatpush1.msra.mxu0 0.0
    %1420 = vmatprep.subr.mxu0 0.0
    %1421 = vmatpush1.msra.mxu0 0.0
    %1422 = vmatprep.subr.mxu0 0.0
    %1423 = vmatpush1.msra.mxu0 0.0
    %1424 = vmatprep.subr.mxu0 0.0
    %1425 = vmatpush1.msra.mxu0 0.0
    %1426 = vmatprep.subr.mxu0 0.0
    %1427 = vmatpush1.msra.mxu0 0.0
    %1428 = vmatprep.subr.mxu0 0.0
    %1429 = vmatpush1.msra.mxu0 0.0
    %1430 = vmatprep.subr.mxu0 0.0
    %1431 = vmatpush1.msra.mxu0 0.0
    %1432 = vmatprep.subr.mxu0 0.0
    %1433 = vmatpush1.msra.mxu0 0.0
    %1434 = vmatprep.subr.mxu0 0.0
    %1435 = vmatpush1.msra.mxu0 0.0
    %1436 = vmatprep.subr.mxu0 0.0
    %1437 = vmatpush1.msra.mxu0 0.0
    %1438 = vmatprep.subr.mxu0 0.0
    %1439 = vmatpush1.msra.mxu0 0.0
    %1440 = vmatprep.subr.mxu0 0.0
    %1441 = vmatpush1.msra.mxu0 0.0
    %1442 = vmatprep.mubr.f32.mxu0 0.0
    %1443 = vmatmul.mubr.f32.gmra.mrb[0].mxu0 %v379
    %v1444 = vpop.f32.mrb[0].mxu0
    %v1445 = vadd.f32 0.0, %v1444
    %v1446 = vpop.f32.mrb[0].mxu0
    %1447 = vmatprep.mubr.f32.mxu0 0.0
    %1448 = vmatmul.mubr.f32.gmra.mrb[0].mxu0 %v382
    %v1449 = vpop.f32.mrb[0].mxu0
    %v1450 = vadd.f32 0.0, %v1449
    %v1451 = vpop.f32.mrb[0].mxu0
    %1452 = vdwg.mxu0
    %v1454 = vsel %vm377, %v363, 0
    %v1457 = vsel %vm377, %v364, 0
    %1459 = vmatprep.subr.mxu0 0.0
    %1460 = vmatpush1.msra.mxu0 %v1377
    %1461 = vmatprep.subr.mxu0 0.0
    %1462 = vmatpush1.msra.mxu0 0.0
    %1463 = vmatprep.subr.mxu0 0.0
    %1464 = vmatpush1.msra.mxu0 0.0
    %1465 = vmatprep.subr.mxu0 0.0
    %1466 = vmatpush1.msra.mxu0 0.0
    %1467 = vmatprep.subr.mxu0 0.0
    %1468 = vmatpush1.msra.mxu0 0.0
    %1469 = vmatprep.subr.mxu0 0.0
    %1470 = vmatpush1.msra.mxu0 0.0
    %1471 = vmatprep.subr.mxu0 0.0
    %1472 = vmatpush1.msra.mxu0 0.0
    %1473 = vmatprep.subr.mxu0 0.0
    %1474 = vmatpush1.msra.mxu0 0.0
    %1475 = vmatprep.subr.mxu0 0.0
    %1476 = vmatpush1.msra.mxu0 0.0
    %1477 = vmatprep.subr.mxu0 0.0
    %1478 = vmatpush1.msra.mxu0 0.0
    %1479 = vmatprep.subr.mxu0 0.0
    %1480 = vmatpush1.msra.mxu0 0.0
    %1481 = vmatprep.subr.mxu0 0.0
    %1482 = vmatpush1.msra.mxu0 0.0
    %1483 = vmatprep.subr.mxu0 0.0
    %1484 = vmatpush1.msra.mxu0 0.0
    %1485 = vmatprep.subr.mxu0 0.0
    %1486 = vmatpush1.msra.mxu0 0.0
    %1487 = vmatprep.subr.mxu0 0.0
    %1488 = vmatpush1.msra.mxu0 0.0
    %1489 = vmatprep.subr.mxu0 0.0
    %1490 = vmatpush1.msra.mxu0 0.0
    %1491 = vmatprep.subr.mxu0 0.0
    %1492 = vmatpush1.msra.mxu0 0.0
    %1493 = vmatprep.subr.mxu0 0.0
    %1494 = vmatpush1.msra.mxu0 0.0
    %1495 = vmatprep.subr.mxu0 0.0
    %1496 = vmatpush1.msra.mxu0 0.0
    %1497 = vmatprep.subr.mxu0 0.0
    %1498 = vmatpush1.msra.mxu0 0.0
    %1499 = vmatprep.subr.mxu0 0.0
    %1500 = vmatpush1.msra.mxu0 0.0
    %1501 = vmatprep.subr.mxu0 0.0
    %1502 = vmatpush1.msra.mxu0 0.0
    %1503 = vmatprep.subr.mxu0 0.0
    %1504 = vmatpush1.msra.mxu0 0.0
    %1505 = vmatprep.subr.mxu0 0.0
    %1506 = vmatpush1.msra.mxu0 0.0
    %1507 = vmatprep.subr.mxu0 0.0
    %1508 = vmatpush1.msra.mxu0 0.0
    %1509 = vmatprep.subr.mxu0 0.0
    %1510 = vmatpush1.msra.mxu0 0.0
    %1511 = vmatprep.subr.mxu0 0.0
    %1512 = vmatpush1.msra.mxu0 0.0
    %1513 = vmatprep.subr.mxu0 0.0
    %1514 = vmatpush1.msra.mxu0 0.0
    %1515 = vmatprep.subr.mxu0 0.0
    %1516 = vmatpush1.msra.mxu0 0.0
    %1517 = vmatprep.subr.mxu0 0.0
    %1518 = vmatpush1.msra.mxu0 0.0
    %1519 = vmatprep.subr.mxu0 0.0
    %1520 = vmatpush1.msra.mxu0 0.0
    %1521 = vmatprep.subr.mxu0 0.0
    %1522 = vmatpush1.msra.mxu0 0.0
    %1523 = vmatprep.mubr.f32.mxu0 0.0
    %1524 = vmatmul.mubr.f32.gmra.mrb[0].mxu0 %v1454
    %v1525 = vpop.f32.mrb[0].mxu0
    %v1526 = vadd.f32 0.0, %v1525
    %v1527 = vpop.f32.mrb[0].mxu0
    %1528 = vmatprep.mubr.f32.mxu0 0.0
    %1529 = vmatmul.mubr.f32.gmra.mrb[0].mxu0 %v1457
    %v1530 = vpop.f32.mrb[0].mxu0
    %v1531 = vadd.f32 0.0, %v1530
    %v1532 = vpop.f32.mrb[0].mxu0
    %1533 = vdwg.mxu0
    %v1534 = vld [vmem:[#allocation31] sm:$0xff]
    %v1535 = vld [vmem:[#allocation31 + $0x8] sm:$0xff]
    %v1536 = vld [vmem:[#allocation31 + $0x10] sm:$0xff]
    %v1537 = vld [vmem:[#allocation31 + $0x18] sm:$0xff]
    %v1538 = vld [vmem:[#allocation32] sm:$0xff]
    %v1539 = vld [vmem:[#allocation32 + $0x8] sm:$0xff]
    %v1540 = vld [vmem:[#allocation32 + $0x10] sm:$0xff]
    %v1541 = vld [vmem:[#allocation32 + $0x18] sm:$0xff]
    %v1543 = vsel %vm1225, %v1526, 0
    %v1546 = vsel %vm1225, %v1531, 0
    %1548 = vmatprep.subr.mxu0 0.0
    %1549 = vmatpush1.msra.mxu0 %v1538
    %1550 = vmatprep.subr.mxu0 0.0
    %1551 = vmatpush1.msra.mxu0 %v1539
    %1552 = vmatprep.subr.mxu0 0.0
    %1553 = vmatpush1.msra.mxu0 %v1540
    %1554 = vmatprep.subr.mxu0 0.0
    %1555 = vmatpush1.msra.mxu0 %v1541
    %1556 = vmatprep.subr.mxu0 0.0
    %1557 = vmatpush1.msra.mxu0 0.0
    %1558 = vmatprep.subr.mxu0 0.0
    %1559 = vmatpush1.msra.mxu0 0.0
    %1560 = vmatprep.subr.mxu0 0.0
    %1561 = vmatpush1.msra.mxu0 0.0
    %1562 = vmatprep.subr.mxu0 0.0
    %1563 = vmatpush1.msra.mxu0 0.0
    %1564 = vmatprep.subr.mxu0 0.0
    %1565 = vmatpush1.msra.mxu0 0.0
    %1566 = vmatprep.subr.mxu0 0.0
    %1567 = vmatpush1.msra.mxu0 0.0
    %1568 = vmatprep.subr.mxu0 0.0
    %1569 = vmatpush1.msra.mxu0 0.0
    %1570 = vmatprep.subr.mxu0 0.0
    %1571 = vmatpush1.msra.mxu0 0.0
    %1572 = vmatprep.subr.mxu0 0.0
    %1573 = vmatpush1.msra.mxu0 0.0
    %1574 = vmatprep.subr.mxu0 0.0
    %1575 = vmatpush1.msra.mxu0 0.0
    %1576 = vmatprep.subr.mxu0 0.0
    %1577 = vmatpush1.msra.mxu0 0.0
    %1578 = vmatprep.subr.mxu0 0.0
    %1579 = vmatpush1.msra.mxu0 0.0
    %1580 = vmatprep.subr.mxu0 0.0
    %1581 = vmatpush1.msra.mxu0 0.0
    %1582 = vmatprep.subr.mxu0 0.0
    %1583 = vmatpush1.msra.mxu0 0.0
    %1584 = vmatprep.subr.mxu0 0.0
    %1585 = vmatpush1.msra.mxu0 0.0
    %1586 = vmatprep.subr.mxu0 0.0
    %1587 = vmatpush1.msra.mxu0 0.0
    %1588 = vmatprep.subr.mxu0 0.0
    %1589 = vmatpush1.msra.mxu0 0.0
    %1590 = vmatprep.subr.mxu0 0.0
    %1591 = vmatpush1.msra.mxu0 0.0
    %1592 = vmatprep.subr.mxu0 0.0
    %1593 = vmatpush1.msra.mxu0 0.0
    %1594 = vmatprep.subr.mxu0 0.0
    %1595 = vmatpush1.msra.mxu0 0.0
    %1596 = vmatprep.subr.mxu0 0.0
    %1597 = vmatpush1.msra.mxu0 0.0
    %1598 = vmatprep.subr.mxu0 0.0
    %1599 = vmatpush1.msra.mxu0 0.0
    %1600 = vmatprep.subr.mxu0 0.0
    %1601 = vmatpush1.msra.mxu0 0.0
    %1602 = vmatprep.subr.mxu0 0.0
    %1603 = vmatpush1.msra.mxu0 0.0
    %1604 = vmatprep.subr.mxu0 0.0
    %1605 = vmatpush1.msra.mxu0 0.0
    %1606 = vmatprep.subr.mxu0 0.0
    %1607 = vmatpush1.msra.mxu0 0.0
    %1608 = vmatprep.subr.mxu0 0.0
    %1609 = vmatpush1.msra.mxu0 0.0
    %1610 = vmatprep.subr.mxu0 0.0
    %1611 = vmatpush1.msra.mxu0 0.0
    %1612 = vmatprep.mubr.f32.mxu0 0.0
    %1613 = vmatmul.mubr.f32.gmra.mrb[0].mxu0 %v1543
    %v1614 = vpop.f32.mrb[0].mxu0
    %v1615 = vadd.f32 0.0, %v1614
    %v1616 = vpop.f32.mrb[0].mxu0
    %1617 = vmatprep.mubr.f32.mxu0 0.0
    %1618 = vmatmul.mubr.f32.gmra.mrb[0].mxu0 %v1546
    %v1619 = vpop.f32.mrb[0].mxu0
    %v1620 = vadd.f32 0.0, %v1619
    %v1621 = vpop.f32.mrb[0].mxu0
    %1622 = vdwg.mxu0
    %v1624 = vsel %vm1225, %v1445, 0
    %v1627 = vsel %vm1225, %v1450, 0
    %1629 = vmatprep.subr.mxu0 0.0
    %1630 = vmatpush1.msra.mxu0 %v1534
    %1631 = vmatprep.subr.mxu0 0.0
    %1632 = vmatpush1.msra.mxu0 %v1535
    %1633 = vmatprep.subr.mxu0 0.0
    %1634 = vmatpush1.msra.mxu0 %v1536
    %1635 = vmatprep.subr.mxu0 0.0
    %1636 = vmatpush1.msra.mxu0 %v1537
    %1637 = vmatprep.subr.mxu0 0.0
    %1638 = vmatpush1.msra.mxu0 0.0
    %1639 = vmatprep.subr.mxu0 0.0
    %1640 = vmatpush1.msra.mxu0 0.0
    %1641 = vmatprep.subr.mxu0 0.0
    %1642 = vmatpush1.msra.mxu0 0.0
    %1643 = vmatprep.subr.mxu0 0.0
    %1644 = vmatpush1.msra.mxu0 0.0
    %1645 = vmatprep.subr.mxu0 0.0
    %1646 = vmatpush1.msra.mxu0 0.0
    %1647 = vmatprep.subr.mxu0 0.0
    %1648 = vmatpush1.msra.mxu0 0.0
    %1649 = vmatprep.subr.mxu0 0.0
    %1650 = vmatpush1.msra.mxu0 0.0
    %1651 = vmatprep.subr.mxu0 0.0
    %1652 = vmatpush1.msra.mxu0 0.0
    %1653 = vmatprep.subr.mxu0 0.0
    %1654 = vmatpush1.msra.mxu0 0.0
    %1655 = vmatprep.subr.mxu0 0.0
    %1656 = vmatpush1.msra.mxu0 0.0
    %1657 = vmatprep.subr.mxu0 0.0
    %1658 = vmatpush1.msra.mxu0 0.0
    %1659 = vmatprep.subr.mxu0 0.0
    %1660 = vmatpush1.msra.mxu0 0.0
    %1661 = vmatprep.subr.mxu0 0.0
    %1662 = vmatpush1.msra.mxu0 0.0
    %1663 = vmatprep.subr.mxu0 0.0
    %1664 = vmatpush1.msra.mxu0 0.0
    %1665 = vmatprep.subr.mxu0 0.0
    %1666 = vmatpush1.msra.mxu0 0.0
    %1667 = vmatprep.subr.mxu0 0.0
    %1668 = vmatpush1.msra.mxu0 0.0
    %1669 = vmatprep.subr.mxu0 0.0
    %1670 = vmatpush1.msra.mxu0 0.0
    %1671 = vmatprep.subr.mxu0 0.0
    %1672 = vmatpush1.msra.mxu0 0.0
    %1673 = vmatprep.subr.mxu0 0.0
    %1674 = vmatpush1.msra.mxu0 0.0
    %1675 = vmatprep.subr.mxu0 0.0
    %1676 = vmatpush1.msra.mxu0 0.0
    %1677 = vmatprep.subr.mxu0 0.0
    %1678 = vmatpush1.msra.mxu0 0.0
    %1679 = vmatprep.subr.mxu0 0.0
    %1680 = vmatpush1.msra.mxu0 0.0
    %1681 = vmatprep.subr.mxu0 0.0
    %1682 = vmatpush1.msra.mxu0 0.0
    %1683 = vmatprep.subr.mxu0 0.0
    %1684 = vmatpush1.msra.mxu0 0.0
    %1685 = vmatprep.subr.mxu0 0.0
    %1686 = vmatpush1.msra.mxu0 0.0
    %1687 = vmatprep.subr.mxu0 0.0
    %1688 = vmatpush1.msra.mxu0 0.0
    %1689 = vmatprep.subr.mxu0 0.0
    %1690 = vmatpush1.msra.mxu0 0.0
    %1691 = vmatprep.subr.mxu0 0.0
    %1692 = vmatpush1.msra.mxu0 0.0
    %1693 = vmatprep.mubr.f32.mxu0 0.0
    %1694 = vmatmul.mubr.f32.gmra.mrb[0].mxu0 %v1624
    %v1695 = vpop.f32.mrb[0].mxu0
    %v1696 = vadd.f32 %v1615, %v1695
    %v1697 = vpop.f32.mrb[0].mxu0
    %1698 = vmatprep.mubr.f32.mxu0 0.0
    %1699 = vmatmul.mubr.f32.gmra.mrb[0].mxu0 %v1627
    %v1700 = vpop.f32.mrb[0].mxu0
    %v1701 = vadd.f32 %v1620, %v1700
    %v1702 = vpop.f32.mrb[0].mxu0
    %1703 = vdwg.mxu0
    %v1704 = vld [vmem:[#allocation34] sm:$0x1]
    %v1706 = vlaneseq
    %v1707 = vshrl.u32 %v1706, 7
    %v1708 = vsub.s32 0, %v1707
    %v1709 = vrot.slane %v1704, %v1708
    %v1711 = vadd.f32 %v1696, %v1709
    %v1712 = vadd.f32 %v1701, %v1709
    %1713 = vst [vmem:[#allocation35] sm:$0xff] %v1711
    %1714 = vst [vmem:[#allocation35 + $0x8] sm:$0xff] %v1712
    // Predicated region
    $region170: #{tpu_custom_call.1} parent=1 // pred_check
      _
    $region171: #{tpu_custom_call.1} parent=1 // pred_check_branch
      %1716 = sbr.rel (0) target = $region173
    $region172: #{tpu_custom_call.1} parent=1 // pred_region
      %s1718 = ssub.s32 256, 256
      %1719 = vsyncadd [#allocation4], %s1718
      %s1720 = sshll.u32 [#allocation35], 4
      %s1721 = int_to_ptr.vmem [resolvable:$true] %s1720
      %1726 = dma.vmem_to_hbm [thread:$0]  %s1721, 256, %s21, [#allocation4], 128, 128, 8
    $region173: #{tpu_custom_call.1} parent=1 // pred_fallthru
      _
    // Predicated region
    $region174: #{tpu_custom_call.1} parent=1 // pred_check
      _
    $region175: #{tpu_custom_call.1} parent=1 // pred_check_branch
      %1728 = sbr.rel (0) target = $region177
    $region176: #{tpu_custom_call.1} parent=1 // pred_region
      %1729 = dma.done [#allocation4], 256
    $region177: #{tpu_custom_call.1} parent=1 // pred_fallthru
      _
    %1730 = vsyncpa [#allocation3], 1
    %1731 = vsyncpa [#allocation6], 1
    %1732 = vsyncpa [#allocation9], 1
    %1733 = vsyncpa [#allocation12], 1
    %1734 = vsyncpa [#allocation15], 1
    %1735 = vsyncpa [#allocation18], 1
    %1736 = vsyncpa [#allocation21], 1
    %1737 = vsyncpa [#allocation24], 1
    %1738 = vsyncpa [#allocation27], 1
    %1739 = vsyncpa [#allocation30], 1
    %1740 = vsyncpa [#allocation33], 1
    %1741 = vsyncpa [#allocation4], 1

</llo_original>
